<compile_context>
chip_gen: v7x
topology: tpu7x:2x2x1
jax: 0.10.0
libtpu: 0.0.40
codegen_flags: <defaults>
</compile_context>

<pallas_src>
import jax
import jax.numpy as jnp
from jax import lax
from jax.experimental import pallas as pl
from jax.experimental.pallas import tpu as pltpu


# -----------------------------------------------------------------------------
# Fused Pallas kernel: all LSTM layers + final FC
# -----------------------------------------------------------------------------
def _make_fused_lstm_kernel(num_layers, T, B, H):
    """Build a kernel running every LSTM layer and the FC in one pallas_call.

    Ref layout (positional):
      x_ref,
      [w_ih_l, w_hh_l, b_l] * num_layers,
      w_fc_ref, b_fc_ref,
      out_ref,
      hseq_sc, gx_sc                      (VMEM scratch)
    """

    def kernel(*refs):
        x_ref = refs[0]
        layer_refs = [tuple(refs[1 + 3 * l: 4 + 3 * l]) for l in range(num_layers)]
        w_fc_ref, b_fc_ref, out_ref = refs[1 + 3 * num_layers: 4 + 3 * num_layers]
        hseq_sc, gx_sc = refs[4 + 3 * num_layers:]

        h_last = None
        for l, (w_ih_ref, w_hh_ref, b_ref) in enumerate(layer_refs):
            # ---- Hoisted input projection: one (T*B, D_in) @ (D_in, 4H) matmul
            # with the combined bias folded in once (not re-added every step).
            if l == 0:
                x_flat = x_ref[...].reshape(T * B, x_ref.shape[-1])       # bf16
            else:
                x_flat = hseq_sc[...].reshape(T * B, H)                   # bf16
            gx = (
                jnp.dot(x_flat, w_ih_ref[...], preferred_element_type=jnp.float32)
                + b_ref[...]
            )
            gx_sc[...] = gx.reshape(T, B, 4 * H)

            is_last = l == num_layers - 1

            def step(t, carry, w_hh_ref=w_hh_ref, is_last=is_last):
                h_prev, c_prev = carry                                # (B, H) f32
                gates = gx_sc[t] + jnp.dot(
                    h_prev.astype(jnp.bfloat16), w_hh_ref[...],
                    preferred_element_type=jnp.float32,
                )                                                     # (B, 4H) f32
                i = jax.nn.sigmoid(gates[:, 0 * H:1 * H])
                f = jax.nn.sigmoid(gates[:, 1 * H:2 * H])
                g = jnp.tanh(gates[:, 2 * H:3 * H])
                o = jax.nn.sigmoid(gates[:, 3 * H:4 * H])
                c = f * c_prev + i * g
                h = o * jnp.tanh(c)              # tanh(c) computed once, reused
                if not is_last:
                    hseq_sc[t] = h.astype(jnp.bfloat16)   # last layer: only h_T
                return (h, c)

            h0 = jnp.zeros((B, H), jnp.float32)
            c0 = jnp.zeros((B, H), jnp.float32)
            # Fully unrolled recurrence: only the h @ W_hh dependency is serial;
            # h/c stay in vregs (loop-carried values, not VMEM scratch).
            h_last, _ = lax.fori_loop(0, T, step, (h0, c0), unroll=True)

        # ---- Fused final FC on the last layer's h_T -------------------------
        out_ref[...] = (
            jnp.dot(h_last.astype(jnp.bfloat16), w_fc_ref[...],
                    preferred_element_type=jnp.float32)
            + b_fc_ref[...]
        )

    return kernel


# -----------------------------------------------------------------------------
# Wrapper
# -----------------------------------------------------------------------------
@jax.jit
def lstm_model_forward(params, x):
    """x: (B, T, input_dim) f32 -> (B, output_dim) f32. h0 = c0 = 0."""
    layers = params["layers"]
    num_layers = len(layers)
    B, T, _ = x.shape
    H = layers[0]["w_hh_t"].shape[0]
    O = params["fc_w_t"].shape[1]

    # Time-major, bf16 stream (halves HBM traffic); accumulation stays f32.
    seq = jnp.transpose(x, (1, 0, 2)).astype(jnp.bfloat16)   # (T, B, D)
    D = seq.shape[-1]

    kernel = _make_fused_lstm_kernel(num_layers, T, B, H)

    in_specs = [pl.BlockSpec((T, B, D), lambda i: (0, 0, 0))]
    args = [seq]
    for lp in layers:
        d_in = lp["w_ih_t"].shape[0]
        in_specs += [
            pl.BlockSpec((d_in, 4 * H), lambda i: (0, 0)),
            pl.BlockSpec((H, 4 * H), lambda i: (0, 0)),
            pl.BlockSpec((1, 4 * H), lambda i: (0, 0)),
        ]
        args += [lp["w_ih_t"], lp["w_hh_t"], lp["b"]]
    in_specs += [
        pl.BlockSpec((H, O), lambda i: (0, 0)),
        pl.BlockSpec((1, O), lambda i: (0, 0)),
    ]
    args += [params["fc_w_t"], params["fc_b"]]

    return pl.pallas_call(
        kernel,
        out_shape=jax.ShapeDtypeStruct((B, O), jnp.float32),
        grid=(1,),
        in_specs=in_specs,
        out_specs=pl.BlockSpec((B, O), lambda i: (0, 0)),
        scratch_shapes=[
            pltpu.VMEM((T, B, H), jnp.bfloat16),     # inter-layer hidden sequence
            pltpu.VMEM((T, B, 4 * H), jnp.float32),  # hoisted input projection
        ],
        compiler_params=pltpu.CompilerParams(
            dimension_semantics=("arbitrary",),
        ),
    )(*args)


def init_params(key, input_dim, hidden_dim, output_dim, num_layers):
    """PyTorch-style uniform(-1/sqrt(H), 1/sqrt(H)) init.

    Matmul weights are stored pre-transposed and in bf16 (f32 accumulation in
    the kernel); biases stay f32 with b_ih + b_hh pre-combined.
    """
    params = {"layers": []}
    k = 1.0 / jnp.sqrt(hidden_dim)
    for layer in range(num_layers):
        d_in = input_dim if layer == 0 else hidden_dim
        key, k1, k2, k3, k4 = jax.random.split(key, 5)
        w_ih = jax.random.uniform(k1, (4 * hidden_dim, d_in), jnp.float32, -k, k)
        w_hh = jax.random.uniform(k2, (4 * hidden_dim, hidden_dim), jnp.float32, -k, k)
        b_ih = jax.random.uniform(k3, (4 * hidden_dim,), jnp.float32, -k, k)
        b_hh = jax.random.uniform(k4, (4 * hidden_dim,), jnp.float32, -k, k)
        params["layers"].append(
            dict(
                w_ih_t=w_ih.T.astype(jnp.bfloat16),          # (D_in, 4H)
                w_hh_t=w_hh.T.astype(jnp.bfloat16),          # (H, 4H)
                b=(b_ih + b_hh).reshape(1, 4 * hidden_dim),  # f32
            )
        )
    key, k5, k6 = jax.random.split(key, 3)
    w_fc = jax.random.uniform(k5, (output_dim, hidden_dim), jnp.float32, -k, k)
    b_fc = jax.random.uniform(k6, (output_dim,), jnp.float32, -k, k)
    params["fc_w_t"] = w_fc.T.astype(jnp.bfloat16)           # (H, O)
    params["fc_b"] = b_fc.reshape(1, output_dim)             # f32
    return params


# -----------------------------------------------------------------------------
# Pure-JAX f32 reference (correctness check only)
# -----------------------------------------------------------------------------
def reference_forward(params, x):
    B = x.shape[0]
    seq = jnp.transpose(x, (1, 0, 2)).astype(jnp.float32)
    for lp in params["layers"]:
        w_ih = lp["w_ih_t"].astype(jnp.float32)
        w_hh = lp["w_hh_t"].astype(jnp.float32)
        b = lp["b"]
        H = w_hh.shape[0]

        def step(carry, x_t, w_ih=w_ih, w_hh=w_hh, b=b, H=H):
            h, c = carry
            gates = x_t @ w_ih + h @ w_hh + b
            i = jax.nn.sigmoid(gates[:, 0 * H:1 * H])
            f = jax.nn.sigmoid(gates[:, 1 * H:2 * H])
            g = jnp.tanh(gates[:, 2 * H:3 * H])
            o = jax.nn.sigmoid(gates[:, 3 * H:4 * H])
            c = f * c + i * g
            h = o * jnp.tanh(c)
            return (h, c), h

        init = (jnp.zeros((B, H), jnp.float32), jnp.zeros((B, H), jnp.float32))
        _, seq = jax.lax.scan(step, init, seq)
    return seq[-1] @ params["fc_w_t"].astype(jnp.float32) + params["fc_b"]


# -----------------------------------------------------------------------------
if __name__ == "__main__":
    B, T = 2, 8
    input_dim, hidden_dim, output_dim, num_layers = 16, 32, 8, 2

    key = jax.random.PRNGKey(0)
    key, pkey, xkey = jax.random.split(key, 3)
    params = init_params(pkey, input_dim, hidden_dim, output_dim, num_layers)
    x = jax.random.normal(xkey, (B, T, input_dim), jnp.float32)

    out = lstm_model_forward(params, x)
    jax.block_until_ready(out)

    ref = reference_forward(params, x)
    assert out.shape == (B, output_dim)
    # bf16 weights / activations in the kernel (f32 accumulation) vs f32 ref.
    assert jnp.allclose(out, ref, atol=2e-2, rtol=2e-2), (out, ref)

    print("KERNEL_OK")
</pallas_src>

<mosaic_0001>
module attributes {stable_mosaic.version = 11 : i64} {
  func.func @kernel(%arg0: i32, %arg1: memref<8x2x16xbf16, #tpu.memory_space<vmem>>, %arg2: memref<16x128xbf16, #tpu.memory_space<vmem>>, %arg3: memref<32x128xbf16, #tpu.memory_space<vmem>>, %arg4: memref<1x128xf32, #tpu.memory_space<vmem>>, %arg5: memref<32x128xbf16, #tpu.memory_space<vmem>>, %arg6: memref<32x128xbf16, #tpu.memory_space<vmem>>, %arg7: memref<1x128xf32, #tpu.memory_space<vmem>>, %arg8: memref<32x8xbf16, #tpu.memory_space<vmem>>, %arg9: memref<1x8xf32, #tpu.memory_space<vmem>>, %arg10: memref<2x8xf32, #tpu.memory_space<vmem>>, %arg11: memref<8x2x32xbf16, #tpu.memory_space<vmem>>, %arg12: memref<8x2x128xf32, #tpu.memory_space<vmem>>) attributes {dimension_semantics = [#tpu.dimension_semantics<arbitrary>], iteration_bounds = array<i64: 1>, scalar_prefetch = 0 : i64, scratch_operands = 2 : i64, tpu.core_type = #tpu.core_type<tc>, window_params = [{pipeline_mode = #tpu.pipeline_mode<synchronous>, transform_indices = @transform_0, window_bounds = array<i64: 8, 2, 16>}, {pipeline_mode = #tpu.pipeline_mode<synchronous>, transform_indices = @transform_1, window_bounds = array<i64: 16, 128>}, {pipeline_mode = #tpu.pipeline_mode<synchronous>, transform_indices = @transform_2, window_bounds = array<i64: 32, 128>}, {pipeline_mode = #tpu.pipeline_mode<synchronous>, transform_indices = @transform_3, window_bounds = array<i64: 1, 128>}, {pipeline_mode = #tpu.pipeline_mode<synchronous>, transform_indices = @transform_4, window_bounds = array<i64: 32, 128>}, {pipeline_mode = #tpu.pipeline_mode<synchronous>, transform_indices = @transform_5, window_bounds = array<i64: 32, 128>}, {pipeline_mode = #tpu.pipeline_mode<synchronous>, transform_indices = @transform_6, window_bounds = array<i64: 1, 128>}, {pipeline_mode = #tpu.pipeline_mode<synchronous>, transform_indices = @transform_7, window_bounds = array<i64: 32, 8>}, {pipeline_mode = #tpu.pipeline_mode<synchronous>, transform_indices = @transform_8, window_bounds = array<i64: 1, 8>}, {pipeline_mode = #tpu.pipeline_mode<synchronous>, transform_indices = @transform_9, window_bounds = array<i64: 2, 8>}]} {
    %c0 = arith.constant 0 : index
    %c0_0 = arith.constant 0 : index
    %c0_1 = arith.constant 0 : index
    %0 = vector.load %arg1[%c0, %c0_0, %c0_1] : memref<8x2x16xbf16, #tpu.memory_space<vmem>>, vector<8x2x16xbf16>
    %1 = vector.shape_cast %0 : vector<8x2x16xbf16> to vector<16x16xbf16>
    %c0_2 = arith.constant 0 : index
    %c0_3 = arith.constant 0 : index
    %2 = vector.load %arg2[%c0_2, %c0_3] : memref<16x128xbf16, #tpu.memory_space<vmem>>, vector<16x128xbf16>
    %cst = arith.constant dense<0.000000e+00> : vector<16x128xf32>
    %3 = tpu.matmul %1, %2, %cst {dimension_numbers = #tpu.dot_dimension_numbers<[1], [0], [0], [1], [0, 0, 1, 1], [], []>} : vector<16x16xbf16>, vector<16x128xbf16>, vector<16x128xf32> -> vector<16x128xf32>
    %c0_4 = arith.constant 0 : index
    %c0_5 = arith.constant 0 : index
    %4 = vector.load %arg4[%c0_4, %c0_5] : memref<1x128xf32, #tpu.memory_space<vmem>>, vector<1x128xf32>
    %5 = vector.broadcast %4 : vector<1x128xf32> to vector<16x128xf32>
    %6 = arith.addf %3, %5 : vector<16x128xf32>
    %7 = vector.shape_cast %6 : vector<16x128xf32> to vector<8x2x128xf32>
    %c0_6 = arith.constant 0 : index
    %c0_7 = arith.constant 0 : index
    %c0_8 = arith.constant 0 : index
    %8 = vector.load %arg12[%c0_6, %c0_7, %c0_8] : memref<8x2x128xf32, #tpu.memory_space<vmem>>, vector<8x2x128xf32>
    tpu.vector_store %arg12[%c0_6, %c0_7, %c0_8], %7 {strides = array<i32>} : memref<8x2x128xf32, #tpu.memory_space<vmem>>, vector<8x2x128xf32>,
    %cst_9 = arith.constant 0.000000e+00 : f32
    %9 = vector.broadcast %cst_9 : f32 to vector<2x32xf32>
    %cst_10 = arith.constant 0.000000e+00 : f32
    %10 = vector.broadcast %cst_10 : f32 to vector<2x32xf32>
    %c0_i32 = arith.constant 0 : i32
    %11 = arith.index_cast %c0_i32 : i32 to index
    %c0_11 = arith.constant 0 : index
    %c0_12 = arith.constant 0 : index
    %12 = vector.load %arg12[%11, %c0_11, %c0_12] : memref<8x2x128xf32, #tpu.memory_space<vmem>>, vector<1x2x128xf32>
    %13 = vector.shape_cast %12 : vector<1x2x128xf32> to vector<2x128xf32>
    %14 = arith.truncf %9 : vector<2x32xf32> to vector<2x32xbf16>
    %c0_13 = arith.constant 0 : index
    %c0_14 = arith.constant 0 : index
    %15 = vector.load %arg3[%c0_13, %c0_14] : memref<32x128xbf16, #tpu.memory_space<vmem>>, vector<32x128xbf16>
    %cst_15 = arith.constant dense<0.000000e+00> : vector<2x128xf32>
    %16 = tpu.matmul %14, %15, %cst_15 {dimension_numbers = #tpu.dot_dimension_numbers<[1], [0], [0], [1], [0, 0, 1, 1], [], []>} : vector<2x32xbf16>, vector<32x128xbf16>, vector<2x128xf32> -> vector<2x128xf32>
    %17 = arith.addf %13, %16 : vector<2x128xf32>
    %18 = vector.extract_strided_slice %17 {offsets = [0, 0], sizes = [2, 32], strides = [1, 1]} : vector<2x128xf32> to vector<2x32xf32>
    %19 = arith.negf %18 : vector<2x32xf32>
    %20 = math.exp %19 : vector<2x32xf32>
    %cst_16 = arith.constant 1.000000e+00 : f32
    %21 = vector.broadcast %cst_16 : f32 to vector<2x32xf32>
    %22 = arith.addf %21, %20 : vector<2x32xf32>
    %23 = arith.divf %21, %22 : vector<2x32xf32>
    %24 = vector.extract_strided_slice %17 {offsets = [0, 32], sizes = [2, 32], strides = [1, 1]} : vector<2x128xf32> to vector<2x32xf32>
    %25 = arith.negf %24 : vector<2x32xf32>
    %26 = math.exp %25 : vector<2x32xf32>
    %cst_17 = arith.constant 1.000000e+00 : f32
    %27 = vector.broadcast %cst_17 : f32 to vector<2x32xf32>
    %28 = arith.addf %27, %26 : vector<2x32xf32>
    %29 = arith.divf %27, %28 : vector<2x32xf32>
    %30 = vector.extract_strided_slice %17 {offsets = [0, 64], sizes = [2, 32], strides = [1, 1]} : vector<2x128xf32> to vector<2x32xf32>
    %31 = math.tanh %30 : vector<2x32xf32>
    %32 = vector.extract_strided_slice %17 {offsets = [0, 96], sizes = [2, 32], strides = [1, 1]} : vector<2x128xf32> to vector<2x32xf32>
    %33 = arith.negf %32 : vector<2x32xf32>
    %34 = math.exp %33 : vector<2x32xf32>
    %cst_18 = arith.constant 1.000000e+00 : f32
    %35 = vector.broadcast %cst_18 : f32 to vector<2x32xf32>
    %36 = arith.addf %35, %34 : vector<2x32xf32>
    %37 = arith.divf %35, %36 : vector<2x32xf32>
    %38 = arith.mulf %29, %10 : vector<2x32xf32>
    %39 = arith.mulf %23, %31 : vector<2x32xf32>
    %40 = arith.addf %38, %39 : vector<2x32xf32>
    %41 = math.tanh %40 : vector<2x32xf32>
    %42 = arith.mulf %37, %41 : vector<2x32xf32>
    %43 = arith.truncf %42 : vector<2x32xf32> to vector<2x32xbf16>
    %44 = arith.index_cast %c0_i32 : i32 to index
    %c0_19 = arith.constant 0 : index
    %c0_20 = arith.constant 0 : index
    %45 = vector.load %arg11[%44, %c0_19, %c0_20] : memref<8x2x32xbf16, #tpu.memory_space<vmem>>, vector<1x2x32xbf16>
    %46 = vector.shape_cast %45 : vector<1x2x32xbf16> to vector<2x32xbf16>
    %47 = vector.shape_cast %43 : vector<2x32xbf16> to vector<1x2x32xbf16>
    tpu.vector_store %arg11[%44, %c0_19, %c0_20], %47 {strides = array<i32>} : memref<8x2x32xbf16, #tpu.memory_space<vmem>>, vector<1x2x32xbf16>,
    %c1_i32 = arith.constant 1 : i32
    %48 = arith.index_cast %c1_i32 : i32 to index
    %c0_21 = arith.constant 0 : index
    %c0_22 = arith.constant 0 : index
    %49 = vector.load %arg12[%48, %c0_21, %c0_22] : memref<8x2x128xf32, #tpu.memory_space<vmem>>, vector<1x2x128xf32>
    %50 = vector.shape_cast %49 : vector<1x2x128xf32> to vector<2x128xf32>
    %51 = arith.truncf %42 : vector<2x32xf32> to vector<2x32xbf16>
    %c0_23 = arith.constant 0 : index
    %c0_24 = arith.constant 0 : index
    %52 = vector.load %arg3[%c0_23, %c0_24] : memref<32x128xbf16, #tpu.memory_space<vmem>>, vector<32x128xbf16>
    %cst_25 = arith.constant dense<0.000000e+00> : vector<2x128xf32>
    %53 = tpu.matmul %51, %52, %cst_25 {dimension_numbers = #tpu.dot_dimension_numbers<[1], [0], [0], [1], [0, 0, 1, 1], [], []>} : vector<2x32xbf16>, vector<32x128xbf16>, vector<2x128xf32> -> vector<2x128xf32>
    %54 = arith.addf %50, %53 : vector<2x128xf32>
    %55 = vector.extract_strided_slice %54 {offsets = [0, 0], sizes = [2, 32], strides = [1, 1]} : vector<2x128xf32> to vector<2x32xf32>
    %56 = arith.negf %55 : vector<2x32xf32>
    %57 = math.exp %56 : vector<2x32xf32>
    %cst_26 = arith.constant 1.000000e+00 : f32
    %58 = vector.broadcast %cst_26 : f32 to vector<2x32xf32>
    %59 = arith.addf %58, %57 : vector<2x32xf32>
    %60 = arith.divf %58, %59 : vector<2x32xf32>
    %61 = vector.extract_strided_slice %54 {offsets = [0, 32], sizes = [2, 32], strides = [1, 1]} : vector<2x128xf32> to vector<2x32xf32>
    %62 = arith.negf %61 : vector<2x32xf32>
    %63 = math.exp %62 : vector<2x32xf32>
    %cst_27 = arith.constant 1.000000e+00 : f32
    %64 = vector.broadcast %cst_27 : f32 to vector<2x32xf32>
    %65 = arith.addf %64, %63 : vector<2x32xf32>
    %66 = arith.divf %64, %65 : vector<2x32xf32>
    %67 = vector.extract_strided_slice %54 {offsets = [0, 64], sizes = [2, 32], strides = [1, 1]} : vector<2x128xf32> to vector<2x32xf32>
    %68 = math.tanh %67 : vector<2x32xf32>
    %69 = vector.extract_strided_slice %54 {offsets = [0, 96], sizes = [2, 32], strides = [1, 1]} : vector<2x128xf32> to vector<2x32xf32>
    %70 = arith.negf %69 : vector<2x32xf32>
    %71 = math.exp %70 : vector<2x32xf32>
    %cst_28 = arith.constant 1.000000e+00 : f32
    %72 = vector.broadcast %cst_28 : f32 to vector<2x32xf32>
    %73 = arith.addf %72, %71 : vector<2x32xf32>
    %74 = arith.divf %72, %73 : vector<2x32xf32>
    %75 = arith.mulf %66, %40 : vector<2x32xf32>
    %76 = arith.mulf %60, %68 : vector<2x32xf32>
    %77 = arith.addf %75, %76 : vector<2x32xf32>
    %78 = math.tanh %77 : vector<2x32xf32>
    %79 = arith.mulf %74, %78 : vector<2x32xf32>
    %80 = arith.truncf %79 : vector<2x32xf32> to vector<2x32xbf16>
    %81 = arith.index_cast %c1_i32 : i32 to index
    %c0_29 = arith.constant 0 : index
    %c0_30 = arith.constant 0 : index
    %82 = vector.load %arg11[%81, %c0_29, %c0_30] : memref<8x2x32xbf16, #tpu.memory_space<vmem>>, vector<1x2x32xbf16>
    %83 = vector.shape_cast %82 : vector<1x2x32xbf16> to vector<2x32xbf16>
    %84 = vector.shape_cast %80 : vector<2x32xbf16> to vector<1x2x32xbf16>
    tpu.vector_store %arg11[%81, %c0_29, %c0_30], %84 {strides = array<i32>} : memref<8x2x32xbf16, #tpu.memory_space<vmem>>, vector<1x2x32xbf16>,
    %c2_i32 = arith.constant 2 : i32
    %85 = arith.index_cast %c2_i32 : i32 to index
    %c0_31 = arith.constant 0 : index
    %c0_32 = arith.constant 0 : index
    %86 = vector.load %arg12[%85, %c0_31, %c0_32] : memref<8x2x128xf32, #tpu.memory_space<vmem>>, vector<1x2x128xf32>
    %87 = vector.shape_cast %86 : vector<1x2x128xf32> to vector<2x128xf32>
    %88 = arith.truncf %79 : vector<2x32xf32> to vector<2x32xbf16>
    %c0_33 = arith.constant 0 : index
    %c0_34 = arith.constant 0 : index
    %89 = vector.load %arg3[%c0_33, %c0_34] : memref<32x128xbf16, #tpu.memory_space<vmem>>, vector<32x128xbf16>
    %cst_35 = arith.constant dense<0.000000e+00> : vector<2x128xf32>
    %90 = tpu.matmul %88, %89, %cst_35 {dimension_numbers = #tpu.dot_dimension_numbers<[1], [0], [0], [1], [0, 0, 1, 1], [], []>} : vector<2x32xbf16>, vector<32x128xbf16>, vector<2x128xf32> -> vector<2x128xf32>
    %91 = arith.addf %87, %90 : vector<2x128xf32>
    %92 = vector.extract_strided_slice %91 {offsets = [0, 0], sizes = [2, 32], strides = [1, 1]} : vector<2x128xf32> to vector<2x32xf32>
    %93 = arith.negf %92 : vector<2x32xf32>
    %94 = math.exp %93 : vector<2x32xf32>
    %cst_36 = arith.constant 1.000000e+00 : f32
    %95 = vector.broadcast %cst_36 : f32 to vector<2x32xf32>
    %96 = arith.addf %95, %94 : vector<2x32xf32>
    %97 = arith.divf %95, %96 : vector<2x32xf32>
    %98 = vector.extract_strided_slice %91 {offsets = [0, 32], sizes = [2, 32], strides = [1, 1]} : vector<2x128xf32> to vector<2x32xf32>
    %99 = arith.negf %98 : vector<2x32xf32>
    %100 = math.exp %99 : vector<2x32xf32>
    %cst_37 = arith.constant 1.000000e+00 : f32
    %101 = vector.broadcast %cst_37 : f32 to vector<2x32xf32>
    %102 = arith.addf %101, %100 : vector<2x32xf32>
    %103 = arith.divf %101, %102 : vector<2x32xf32>
    %104 = vector.extract_strided_slice %91 {offsets = [0, 64], sizes = [2, 32], strides = [1, 1]} : vector<2x128xf32> to vector<2x32xf32>
    %105 = math.tanh %104 : vector<2x32xf32>
    %106 = vector.extract_strided_slice %91 {offsets = [0, 96], sizes = [2, 32], strides = [1, 1]} : vector<2x128xf32> to vector<2x32xf32>
    %107 = arith.negf %106 : vector<2x32xf32>
    %108 = math.exp %107 : vector<2x32xf32>
    %cst_38 = arith.constant 1.000000e+00 : f32
    %109 = vector.broadcast %cst_38 : f32 to vector<2x32xf32>
    %110 = arith.addf %109, %108 : vector<2x32xf32>
    %111 = arith.divf %109, %110 : vector<2x32xf32>
    %112 = arith.mulf %103, %77 : vector<2x32xf32>
    %113 = arith.mulf %97, %105 : vector<2x32xf32>
    %114 = arith.addf %112, %113 : vector<2x32xf32>
    %115 = math.tanh %114 : vector<2x32xf32>
    %116 = arith.mulf %111, %115 : vector<2x32xf32>
    %117 = arith.truncf %116 : vector<2x32xf32> to vector<2x32xbf16>
    %118 = arith.index_cast %c2_i32 : i32 to index
    %c0_39 = arith.constant 0 : index
    %c0_40 = arith.constant 0 : index
    %119 = vector.load %arg11[%118, %c0_39, %c0_40] : memref<8x2x32xbf16, #tpu.memory_space<vmem>>, vector<1x2x32xbf16>
    %120 = vector.shape_cast %119 : vector<1x2x32xbf16> to vector<2x32xbf16>
    %121 = vector.shape_cast %117 : vector<2x32xbf16> to vector<1x2x32xbf16>
    tpu.vector_store %arg11[%118, %c0_39, %c0_40], %121 {strides = array<i32>} : memref<8x2x32xbf16, #tpu.memory_space<vmem>>, vector<1x2x32xbf16>,
    %c3_i32 = arith.constant 3 : i32
    %122 = arith.index_cast %c3_i32 : i32 to index
    %c0_41 = arith.constant 0 : index
    %c0_42 = arith.constant 0 : index
    %123 = vector.load %arg12[%122, %c0_41, %c0_42] : memref<8x2x128xf32, #tpu.memory_space<vmem>>, vector<1x2x128xf32>
    %124 = vector.shape_cast %123 : vector<1x2x128xf32> to vector<2x128xf32>
    %125 = arith.truncf %116 : vector<2x32xf32> to vector<2x32xbf16>
    %c0_43 = arith.constant 0 : index
    %c0_44 = arith.constant 0 : index
    %126 = vector.load %arg3[%c0_43, %c0_44] : memref<32x128xbf16, #tpu.memory_space<vmem>>, vector<32x128xbf16>
    %cst_45 = arith.constant dense<0.000000e+00> : vector<2x128xf32>
    %127 = tpu.matmul %125, %126, %cst_45 {dimension_numbers = #tpu.dot_dimension_numbers<[1], [0], [0], [1], [0, 0, 1, 1], [], []>} : vector<2x32xbf16>, vector<32x128xbf16>, vector<2x128xf32> -> vector<2x128xf32>
    %128 = arith.addf %124, %127 : vector<2x128xf32>
    %129 = vector.extract_strided_slice %128 {offsets = [0, 0], sizes = [2, 32], strides = [1, 1]} : vector<2x128xf32> to vector<2x32xf32>
    %130 = arith.negf %129 : vector<2x32xf32>
    %131 = math.exp %130 : vector<2x32xf32>
    %cst_46 = arith.constant 1.000000e+00 : f32
    %132 = vector.broadcast %cst_46 : f32 to vector<2x32xf32>
    %133 = arith.addf %132, %131 : vector<2x32xf32>
    %134 = arith.divf %132, %133 : vector<2x32xf32>
    %135 = vector.extract_strided_slice %128 {offsets = [0, 32], sizes = [2, 32], strides = [1, 1]} : vector<2x128xf32> to vector<2x32xf32>
    %136 = arith.negf %135 : vector<2x32xf32>
    %137 = math.exp %136 : vector<2x32xf32>
    %cst_47 = arith.constant 1.000000e+00 : f32
    %138 = vector.broadcast %cst_47 : f32 to vector<2x32xf32>
    %139 = arith.addf %138, %137 : vector<2x32xf32>
    %140 = arith.divf %138, %139 : vector<2x32xf32>
    %141 = vector.extract_strided_slice %128 {offsets = [0, 64], sizes = [2, 32], strides = [1, 1]} : vector<2x128xf32> to vector<2x32xf32>
    %142 = math.tanh %141 : vector<2x32xf32>
    %143 = vector.extract_strided_slice %128 {offsets = [0, 96], sizes = [2, 32], strides = [1, 1]} : vector<2x128xf32> to vector<2x32xf32>
    %144 = arith.negf %143 : vector<2x32xf32>
    %145 = math.exp %144 : vector<2x32xf32>
    %cst_48 = arith.constant 1.000000e+00 : f32
    %146 = vector.broadcast %cst_48 : f32 to vector<2x32xf32>
    %147 = arith.addf %146, %145 : vector<2x32xf32>
    %148 = arith.divf %146, %147 : vector<2x32xf32>
    %149 = arith.mulf %140, %114 : vector<2x32xf32>
    %150 = arith.mulf %134, %142 : vector<2x32xf32>
    %151 = arith.addf %149, %150 : vector<2x32xf32>
    %152 = math.tanh %151 : vector<2x32xf32>
    %153 = arith.mulf %148, %152 : vector<2x32xf32>
    %154 = arith.truncf %153 : vector<2x32xf32> to vector<2x32xbf16>
    %155 = arith.index_cast %c3_i32 : i32 to index
    %c0_49 = arith.constant 0 : index
    %c0_50 = arith.constant 0 : index
    %156 = vector.load %arg11[%155, %c0_49, %c0_50] : memref<8x2x32xbf16, #tpu.memory_space<vmem>>, vector<1x2x32xbf16>
    %157 = vector.shape_cast %156 : vector<1x2x32xbf16> to vector<2x32xbf16>
    %158 = vector.shape_cast %154 : vector<2x32xbf16> to vector<1x2x32xbf16>
    tpu.vector_store %arg11[%155, %c0_49, %c0_50], %158 {strides = array<i32>} : memref<8x2x32xbf16, #tpu.memory_space<vmem>>, vector<1x2x32xbf16>,
    %c4_i32 = arith.constant 4 : i32
    %159 = arith.index_cast %c4_i32 : i32 to index
    %c0_51 = arith.constant 0 : index
    %c0_52 = arith.constant 0 : index
    %160 = vector.load %arg12[%159, %c0_51, %c0_52] : memref<8x2x128xf32, #tpu.memory_space<vmem>>, vector<1x2x128xf32>
    %161 = vector.shape_cast %160 : vector<1x2x128xf32> to vector<2x128xf32>
    %162 = arith.truncf %153 : vector<2x32xf32> to vector<2x32xbf16>
    %c0_53 = arith.constant 0 : index
    %c0_54 = arith.constant 0 : index
    %163 = vector.load %arg3[%c0_53, %c0_54] : memref<32x128xbf16, #tpu.memory_space<vmem>>, vector<32x128xbf16>
    %cst_55 = arith.constant dense<0.000000e+00> : vector<2x128xf32>
    %164 = tpu.matmul %162, %163, %cst_55 {dimension_numbers = #tpu.dot_dimension_numbers<[1], [0], [0], [1], [0, 0, 1, 1], [], []>} : vector<2x32xbf16>, vector<32x128xbf16>, vector<2x128xf32> -> vector<2x128xf32>
    %165 = arith.addf %161, %164 : vector<2x128xf32>
    %166 = vector.extract_strided_slice %165 {offsets = [0, 0], sizes = [2, 32], strides = [1, 1]} : vector<2x128xf32> to vector<2x32xf32>
    %167 = arith.negf %166 : vector<2x32xf32>
    %168 = math.exp %167 : vector<2x32xf32>
    %cst_56 = arith.constant 1.000000e+00 : f32
    %169 = vector.broadcast %cst_56 : f32 to vector<2x32xf32>
    %170 = arith.addf %169, %168 : vector<2x32xf32>
    %171 = arith.divf %169, %170 : vector<2x32xf32>
    %172 = vector.extract_strided_slice %165 {offsets = [0, 32], sizes = [2, 32], strides = [1, 1]} : vector<2x128xf32> to vector<2x32xf32>
    %173 = arith.negf %172 : vector<2x32xf32>
    %174 = math.exp %173 : vector<2x32xf32>
    %cst_57 = arith.constant 1.000000e+00 : f32
    %175 = vector.broadcast %cst_57 : f32 to vector<2x32xf32>
    %176 = arith.addf %175, %174 : vector<2x32xf32>
    %177 = arith.divf %175, %176 : vector<2x32xf32>
    %178 = vector.extract_strided_slice %165 {offsets = [0, 64], sizes = [2, 32], strides = [1, 1]} : vector<2x128xf32> to vector<2x32xf32>
    %179 = math.tanh %178 : vector<2x32xf32>
    %180 = vector.extract_strided_slice %165 {offsets = [0, 96], sizes = [2, 32], strides = [1, 1]} : vector<2x128xf32> to vector<2x32xf32>
    %181 = arith.negf %180 : vector<2x32xf32>
    %182 = math.exp %181 : vector<2x32xf32>
    %cst_58 = arith.constant 1.000000e+00 : f32
    %183 = vector.broadcast %cst_58 : f32 to vector<2x32xf32>
    %184 = arith.addf %183, %182 : vector<2x32xf32>
    %185 = arith.divf %183, %184 : vector<2x32xf32>
    %186 = arith.mulf %177, %151 : vector<2x32xf32>
    %187 = arith.mulf %171, %179 : vector<2x32xf32>
    %188 = arith.addf %186, %187 : vector<2x32xf32>
    %189 = math.tanh %188 : vector<2x32xf32>
    %190 = arith.mulf %185, %189 : vector<2x32xf32>
    %191 = arith.truncf %190 : vector<2x32xf32> to vector<2x32xbf16>
    %192 = arith.index_cast %c4_i32 : i32 to index
    %c0_59 = arith.constant 0 : index
    %c0_60 = arith.constant 0 : index
    %193 = vector.load %arg11[%192, %c0_59, %c0_60] : memref<8x2x32xbf16, #tpu.memory_space<vmem>>, vector<1x2x32xbf16>
    %194 = vector.shape_cast %193 : vector<1x2x32xbf16> to vector<2x32xbf16>
    %195 = vector.shape_cast %191 : vector<2x32xbf16> to vector<1x2x32xbf16>
    tpu.vector_store %arg11[%192, %c0_59, %c0_60], %195 {strides = array<i32>} : memref<8x2x32xbf16, #tpu.memory_space<vmem>>, vector<1x2x32xbf16>,
    %c5_i32 = arith.constant 5 : i32
    %196 = arith.index_cast %c5_i32 : i32 to index
    %c0_61 = arith.constant 0 : index
    %c0_62 = arith.constant 0 : index
    %197 = vector.load %arg12[%196, %c0_61, %c0_62] : memref<8x2x128xf32, #tpu.memory_space<vmem>>, vector<1x2x128xf32>
    %198 = vector.shape_cast %197 : vector<1x2x128xf32> to vector<2x128xf32>
    %199 = arith.truncf %190 : vector<2x32xf32> to vector<2x32xbf16>
    %c0_63 = arith.constant 0 : index
    %c0_64 = arith.constant 0 : index
    %200 = vector.load %arg3[%c0_63, %c0_64] : memref<32x128xbf16, #tpu.memory_space<vmem>>, vector<32x128xbf16>
    %cst_65 = arith.constant dense<0.000000e+00> : vector<2x128xf32>
    %201 = tpu.matmul %199, %200, %cst_65 {dimension_numbers = #tpu.dot_dimension_numbers<[1], [0], [0], [1], [0, 0, 1, 1], [], []>} : vector<2x32xbf16>, vector<32x128xbf16>, vector<2x128xf32> -> vector<2x128xf32>
    %202 = arith.addf %198, %201 : vector<2x128xf32>
    %203 = vector.extract_strided_slice %202 {offsets = [0, 0], sizes = [2, 32], strides = [1, 1]} : vector<2x128xf32> to vector<2x32xf32>
    %204 = arith.negf %203 : vector<2x32xf32>
    %205 = math.exp %204 : vector<2x32xf32>
    %cst_66 = arith.constant 1.000000e+00 : f32
    %206 = vector.broadcast %cst_66 : f32 to vector<2x32xf32>
    %207 = arith.addf %206, %205 : vector<2x32xf32>
    %208 = arith.divf %206, %207 : vector<2x32xf32>
    %209 = vector.extract_strided_slice %202 {offsets = [0, 32], sizes = [2, 32], strides = [1, 1]} : vector<2x128xf32> to vector<2x32xf32>
    %210 = arith.negf %209 : vector<2x32xf32>
    %211 = math.exp %210 : vector<2x32xf32>
    %cst_67 = arith.constant 1.000000e+00 : f32
    %212 = vector.broadcast %cst_67 : f32 to vector<2x32xf32>
    %213 = arith.addf %212, %211 : vector<2x32xf32>
    %214 = arith.divf %212, %213 : vector<2x32xf32>
    %215 = vector.extract_strided_slice %202 {offsets = [0, 64], sizes = [2, 32], strides = [1, 1]} : vector<2x128xf32> to vector<2x32xf32>
    %216 = math.tanh %215 : vector<2x32xf32>
    %217 = vector.extract_strided_slice %202 {offsets = [0, 96], sizes = [2, 32], strides = [1, 1]} : vector<2x128xf32> to vector<2x32xf32>
    %218 = arith.negf %217 : vector<2x32xf32>
    %219 = math.exp %218 : vector<2x32xf32>
    %cst_68 = arith.constant 1.000000e+00 : f32
    %220 = vector.broadcast %cst_68 : f32 to vector<2x32xf32>
    %221 = arith.addf %220, %219 : vector<2x32xf32>
    %222 = arith.divf %220, %221 : vector<2x32xf32>
    %223 = arith.mulf %214, %188 : vector<2x32xf32>
    %224 = arith.mulf %208, %216 : vector<2x32xf32>
    %225 = arith.addf %223, %224 : vector<2x32xf32>
    %226 = math.tanh %225 : vector<2x32xf32>
    %227 = arith.mulf %222, %226 : vector<2x32xf32>
    %228 = arith.truncf %227 : vector<2x32xf32> to vector<2x32xbf16>
    %229 = arith.index_cast %c5_i32 : i32 to index
    %c0_69 = arith.constant 0 : index
    %c0_70 = arith.constant 0 : index
    %230 = vector.load %arg11[%229, %c0_69, %c0_70] : memref<8x2x32xbf16, #tpu.memory_space<vmem>>, vector<1x2x32xbf16>
    %231 = vector.shape_cast %230 : vector<1x2x32xbf16> to vector<2x32xbf16>
    %232 = vector.shape_cast %228 : vector<2x32xbf16> to vector<1x2x32xbf16>
    tpu.vector_store %arg11[%229, %c0_69, %c0_70], %232 {strides = array<i32>} : memref<8x2x32xbf16, #tpu.memory_space<vmem>>, vector<1x2x32xbf16>,
    %c6_i32 = arith.constant 6 : i32
    %233 = arith.index_cast %c6_i32 : i32 to index
    %c0_71 = arith.constant 0 : index
    %c0_72 = arith.constant 0 : index
    %234 = vector.load %arg12[%233, %c0_71, %c0_72] : memref<8x2x128xf32, #tpu.memory_space<vmem>>, vector<1x2x128xf32>
    %235 = vector.shape_cast %234 : vector<1x2x128xf32> to vector<2x128xf32>
    %236 = arith.truncf %227 : vector<2x32xf32> to vector<2x32xbf16>
    %c0_73 = arith.constant 0 : index
    %c0_74 = arith.constant 0 : index
    %237 = vector.load %arg3[%c0_73, %c0_74] : memref<32x128xbf16, #tpu.memory_space<vmem>>, vector<32x128xbf16>
    %cst_75 = arith.constant dense<0.000000e+00> : vector<2x128xf32>
    %238 = tpu.matmul %236, %237, %cst_75 {dimension_numbers = #tpu.dot_dimension_numbers<[1], [0], [0], [1], [0, 0, 1, 1], [], []>} : vector<2x32xbf16>, vector<32x128xbf16>, vector<2x128xf32> -> vector<2x128xf32>
    %239 = arith.addf %235, %238 : vector<2x128xf32>
    %240 = vector.extract_strided_slice %239 {offsets = [0, 0], sizes = [2, 32], strides = [1, 1]} : vector<2x128xf32> to vector<2x32xf32>
    %241 = arith.negf %240 : vector<2x32xf32>
    %242 = math.exp %241 : vector<2x32xf32>
    %cst_76 = arith.constant 1.000000e+00 : f32
    %243 = vector.broadcast %cst_76 : f32 to vector<2x32xf32>
    %244 = arith.addf %243, %242 : vector<2x32xf32>
    %245 = arith.divf %243, %244 : vector<2x32xf32>
    %246 = vector.extract_strided_slice %239 {offsets = [0, 32], sizes = [2, 32], strides = [1, 1]} : vector<2x128xf32> to vector<2x32xf32>
    %247 = arith.negf %246 : vector<2x32xf32>
    %248 = math.exp %247 : vector<2x32xf32>
    %cst_77 = arith.constant 1.000000e+00 : f32
    %249 = vector.broadcast %cst_77 : f32 to vector<2x32xf32>
    %250 = arith.addf %249, %248 : vector<2x32xf32>
    %251 = arith.divf %249, %250 : vector<2x32xf32>
    %252 = vector.extract_strided_slice %239 {offsets = [0, 64], sizes = [2, 32], strides = [1, 1]} : vector<2x128xf32> to vector<2x32xf32>
    %253 = math.tanh %252 : vector<2x32xf32>
    %254 = vector.extract_strided_slice %239 {offsets = [0, 96], sizes = [2, 32], strides = [1, 1]} : vector<2x128xf32> to vector<2x32xf32>
    %255 = arith.negf %254 : vector<2x32xf32>
    %256 = math.exp %255 : vector<2x32xf32>
    %cst_78 = arith.constant 1.000000e+00 : f32
    %257 = vector.broadcast %cst_78 : f32 to vector<2x32xf32>
    %258 = arith.addf %257, %256 : vector<2x32xf32>
    %259 = arith.divf %257, %258 : vector<2x32xf32>
    %260 = arith.mulf %251, %225 : vector<2x32xf32>
    %261 = arith.mulf %245, %253 : vector<2x32xf32>
    %262 = arith.addf %260, %261 : vector<2x32xf32>
    %263 = math.tanh %262 : vector<2x32xf32>
    %264 = arith.mulf %259, %263 : vector<2x32xf32>
    %265 = arith.truncf %264 : vector<2x32xf32> to vector<2x32xbf16>
    %266 = arith.index_cast %c6_i32 : i32 to index
    %c0_79 = arith.constant 0 : index
    %c0_80 = arith.constant 0 : index
    %267 = vector.load %arg11[%266, %c0_79, %c0_80] : memref<8x2x32xbf16, #tpu.memory_space<vmem>>, vector<1x2x32xbf16>
    %268 = vector.shape_cast %267 : vector<1x2x32xbf16> to vector<2x32xbf16>
    %269 = vector.shape_cast %265 : vector<2x32xbf16> to vector<1x2x32xbf16>
    tpu.vector_store %arg11[%266, %c0_79, %c0_80], %269 {strides = array<i32>} : memref<8x2x32xbf16, #tpu.memory_space<vmem>>, vector<1x2x32xbf16>,
    %c7_i32 = arith.constant 7 : i32
    %270 = arith.index_cast %c7_i32 : i32 to index
    %c0_81 = arith.constant 0 : index
    %c0_82 = arith.constant 0 : index
    %271 = vector.load %arg12[%270, %c0_81, %c0_82] : memref<8x2x128xf32, #tpu.memory_space<vmem>>, vector<1x2x128xf32>
    %272 = vector.shape_cast %271 : vector<1x2x128xf32> to vector<2x128xf32>
    %273 = arith.truncf %264 : vector<2x32xf32> to vector<2x32xbf16>
    %c0_83 = arith.constant 0 : index
    %c0_84 = arith.constant 0 : index
    %274 = vector.load %arg3[%c0_83, %c0_84] : memref<32x128xbf16, #tpu.memory_space<vmem>>, vector<32x128xbf16>
    %cst_85 = arith.constant dense<0.000000e+00> : vector<2x128xf32>
    %275 = tpu.matmul %273, %274, %cst_85 {dimension_numbers = #tpu.dot_dimension_numbers<[1], [0], [0], [1], [0, 0, 1, 1], [], []>} : vector<2x32xbf16>, vector<32x128xbf16>, vector<2x128xf32> -> vector<2x128xf32>
    %276 = arith.addf %272, %275 : vector<2x128xf32>
    %277 = vector.extract_strided_slice %276 {offsets = [0, 0], sizes = [2, 32], strides = [1, 1]} : vector<2x128xf32> to vector<2x32xf32>
    %278 = arith.negf %277 : vector<2x32xf32>
    %279 = math.exp %278 : vector<2x32xf32>
    %cst_86 = arith.constant 1.000000e+00 : f32
    %280 = vector.broadcast %cst_86 : f32 to vector<2x32xf32>
    %281 = arith.addf %280, %279 : vector<2x32xf32>
    %282 = arith.divf %280, %281 : vector<2x32xf32>
    %283 = vector.extract_strided_slice %276 {offsets = [0, 32], sizes = [2, 32], strides = [1, 1]} : vector<2x128xf32> to vector<2x32xf32>
    %284 = arith.negf %283 : vector<2x32xf32>
    %285 = math.exp %284 : vector<2x32xf32>
    %cst_87 = arith.constant 1.000000e+00 : f32
    %286 = vector.broadcast %cst_87 : f32 to vector<2x32xf32>
    %287 = arith.addf %286, %285 : vector<2x32xf32>
    %288 = arith.divf %286, %287 : vector<2x32xf32>
    %289 = vector.extract_strided_slice %276 {offsets = [0, 64], sizes = [2, 32], strides = [1, 1]} : vector<2x128xf32> to vector<2x32xf32>
    %290 = math.tanh %289 : vector<2x32xf32>
    %291 = vector.extract_strided_slice %276 {offsets = [0, 96], sizes = [2, 32], strides = [1, 1]} : vector<2x128xf32> to vector<2x32xf32>
    %292 = arith.negf %291 : vector<2x32xf32>
    %293 = math.exp %292 : vector<2x32xf32>
    %cst_88 = arith.constant 1.000000e+00 : f32
    %294 = vector.broadcast %cst_88 : f32 to vector<2x32xf32>
    %295 = arith.addf %294, %293 : vector<2x32xf32>
    %296 = arith.divf %294, %295 : vector<2x32xf32>
    %297 = arith.mulf %288, %262 : vector<2x32xf32>
    %298 = arith.mulf %282, %290 : vector<2x32xf32>
    %299 = arith.addf %297, %298 : vector<2x32xf32>
    %300 = math.tanh %299 : vector<2x32xf32>
    %301 = arith.mulf %296, %300 : vector<2x32xf32>
    %302 = arith.truncf %301 : vector<2x32xf32> to vector<2x32xbf16>
    %303 = arith.index_cast %c7_i32 : i32 to index
    %c0_89 = arith.constant 0 : index
    %c0_90 = arith.constant 0 : index
    %304 = vector.load %arg11[%303, %c0_89, %c0_90] : memref<8x2x32xbf16, #tpu.memory_space<vmem>>, vector<1x2x32xbf16>
    %305 = vector.shape_cast %304 : vector<1x2x32xbf16> to vector<2x32xbf16>
    %306 = vector.shape_cast %302 : vector<2x32xbf16> to vector<1x2x32xbf16>
    tpu.vector_store %arg11[%303, %c0_89, %c0_90], %306 {strides = array<i32>} : memref<8x2x32xbf16, #tpu.memory_space<vmem>>, vector<1x2x32xbf16>,
    %c8_i32 = arith.constant 8 : i32
    %c0_91 = arith.constant 0 : index
    %c0_92 = arith.constant 0 : index
    %c0_93 = arith.constant 0 : index
    %307 = vector.load %arg11[%c0_91, %c0_92, %c0_93] : memref<8x2x32xbf16, #tpu.memory_space<vmem>>, vector<8x2x32xbf16>
    %308 = vector.shape_cast %307 : vector<8x2x32xbf16> to vector<16x32xbf16>
    %c0_94 = arith.constant 0 : index
    %c0_95 = arith.constant 0 : index
    %309 = vector.load %arg5[%c0_94, %c0_95] : memref<32x128xbf16, #tpu.memory_space<vmem>>, vector<32x128xbf16>
    %cst_96 = arith.constant dense<0.000000e+00> : vector<16x128xf32>
    %310 = tpu.matmul %308, %309, %cst_96 {dimension_numbers = #tpu.dot_dimension_numbers<[1], [0], [0], [1], [0, 0, 1, 1], [], []>} : vector<16x32xbf16>, vector<32x128xbf16>, vector<16x128xf32> -> vector<16x128xf32>
    %c0_97 = arith.constant 0 : index
    %c0_98 = arith.constant 0 : index
    %311 = vector.load %arg7[%c0_97, %c0_98] : memref<1x128xf32, #tpu.memory_space<vmem>>, vector<1x128xf32>
    %312 = vector.broadcast %311 : vector<1x128xf32> to vector<16x128xf32>
    %313 = arith.addf %310, %312 : vector<16x128xf32>
    %314 = vector.shape_cast %313 : vector<16x128xf32> to vector<8x2x128xf32>
    %c0_99 = arith.constant 0 : index
    %c0_100 = arith.constant 0 : index
    %c0_101 = arith.constant 0 : index
    %315 = vector.load %arg12[%c0_99, %c0_100, %c0_101] : memref<8x2x128xf32, #tpu.memory_space<vmem>>, vector<8x2x128xf32>
    tpu.vector_store %arg12[%c0_99, %c0_100, %c0_101], %314 {strides = array<i32>} : memref<8x2x128xf32, #tpu.memory_space<vmem>>, vector<8x2x128xf32>,
    %cst_102 = arith.constant 0.000000e+00 : f32
    %316 = vector.broadcast %cst_102 : f32 to vector<2x32xf32>
    %cst_103 = arith.constant 0.000000e+00 : f32
    %317 = vector.broadcast %cst_103 : f32 to vector<2x32xf32>
    %c0_i32_104 = arith.constant 0 : i32
    %318 = arith.index_cast %c0_i32_104 : i32 to index
    %c0_105 = arith.constant 0 : index
    %c0_106 = arith.constant 0 : index
    %319 = vector.load %arg12[%318, %c0_105, %c0_106] : memref<8x2x128xf32, #tpu.memory_space<vmem>>, vector<1x2x128xf32>
    %320 = vector.shape_cast %319 : vector<1x2x128xf32> to vector<2x128xf32>
    %321 = arith.truncf %316 : vector<2x32xf32> to vector<2x32xbf16>
    %c0_107 = arith.constant 0 : index
    %c0_108 = arith.constant 0 : index
    %322 = vector.load %arg6[%c0_107, %c0_108] : memref<32x128xbf16, #tpu.memory_space<vmem>>, vector<32x128xbf16>
    %cst_109 = arith.constant dense<0.000000e+00> : vector<2x128xf32>
    %323 = tpu.matmul %321, %322, %cst_109 {dimension_numbers = #tpu.dot_dimension_numbers<[1], [0], [0], [1], [0, 0, 1, 1], [], []>} : vector<2x32xbf16>, vector<32x128xbf16>, vector<2x128xf32> -> vector<2x128xf32>
    %324 = arith.addf %320, %323 : vector<2x128xf32>
    %325 = vector.extract_strided_slice %324 {offsets = [0, 0], sizes = [2, 32], strides = [1, 1]} : vector<2x128xf32> to vector<2x32xf32>
    %326 = arith.negf %325 : vector<2x32xf32>
    %327 = math.exp %326 : vector<2x32xf32>
    %cst_110 = arith.constant 1.000000e+00 : f32
    %328 = vector.broadcast %cst_110 : f32 to vector<2x32xf32>
    %329 = arith.addf %328, %327 : vector<2x32xf32>
    %330 = arith.divf %328, %329 : vector<2x32xf32>
    %331 = vector.extract_strided_slice %324 {offsets = [0, 32], sizes = [2, 32], strides = [1, 1]} : vector<2x128xf32> to vector<2x32xf32>
    %332 = arith.negf %331 : vector<2x32xf32>
    %333 = math.exp %332 : vector<2x32xf32>
    %cst_111 = arith.constant 1.000000e+00 : f32
    %334 = vector.broadcast %cst_111 : f32 to vector<2x32xf32>
    %335 = arith.addf %334, %333 : vector<2x32xf32>
    %336 = arith.divf %334, %335 : vector<2x32xf32>
    %337 = vector.extract_strided_slice %324 {offsets = [0, 64], sizes = [2, 32], strides = [1, 1]} : vector<2x128xf32> to vector<2x32xf32>
    %338 = math.tanh %337 : vector<2x32xf32>
    %339 = vector.extract_strided_slice %324 {offsets = [0, 96], sizes = [2, 32], strides = [1, 1]} : vector<2x128xf32> to vector<2x32xf32>
    %340 = arith.negf %339 : vector<2x32xf32>
    %341 = math.exp %340 : vector<2x32xf32>
    %cst_112 = arith.constant 1.000000e+00 : f32
    %342 = vector.broadcast %cst_112 : f32 to vector<2x32xf32>
    %343 = arith.addf %342, %341 : vector<2x32xf32>
    %344 = arith.divf %342, %343 : vector<2x32xf32>
    %345 = arith.mulf %336, %317 : vector<2x32xf32>
    %346 = arith.mulf %330, %338 : vector<2x32xf32>
    %347 = arith.addf %345, %346 : vector<2x32xf32>
    %348 = math.tanh %347 : vector<2x32xf32>
    %349 = arith.mulf %344, %348 : vector<2x32xf32>
    %c1_i32_113 = arith.constant 1 : i32
    %350 = arith.index_cast %c1_i32_113 : i32 to index
    %c0_114 = arith.constant 0 : index
    %c0_115 = arith.constant 0 : index
    %351 = vector.load %arg12[%350, %c0_114, %c0_115] : memref<8x2x128xf32, #tpu.memory_space<vmem>>, vector<1x2x128xf32>
    %352 = vector.shape_cast %351 : vector<1x2x128xf32> to vector<2x128xf32>
    %353 = arith.truncf %349 : vector<2x32xf32> to vector<2x32xbf16>
    %c0_116 = arith.constant 0 : index
    %c0_117 = arith.constant 0 : index
    %354 = vector.load %arg6[%c0_116, %c0_117] : memref<32x128xbf16, #tpu.memory_space<vmem>>, vector<32x128xbf16>
    %cst_118 = arith.constant dense<0.000000e+00> : vector<2x128xf32>
    %355 = tpu.matmul %353, %354, %cst_118 {dimension_numbers = #tpu.dot_dimension_numbers<[1], [0], [0], [1], [0, 0, 1, 1], [], []>} : vector<2x32xbf16>, vector<32x128xbf16>, vector<2x128xf32> -> vector<2x128xf32>
    %356 = arith.addf %352, %355 : vector<2x128xf32>
    %357 = vector.extract_strided_slice %356 {offsets = [0, 0], sizes = [2, 32], strides = [1, 1]} : vector<2x128xf32> to vector<2x32xf32>
    %358 = arith.negf %357 : vector<2x32xf32>
    %359 = math.exp %358 : vector<2x32xf32>
    %cst_119 = arith.constant 1.000000e+00 : f32
    %360 = vector.broadcast %cst_119 : f32 to vector<2x32xf32>
    %361 = arith.addf %360, %359 : vector<2x32xf32>
    %362 = arith.divf %360, %361 : vector<2x32xf32>
    %363 = vector.extract_strided_slice %356 {offsets = [0, 32], sizes = [2, 32], strides = [1, 1]} : vector<2x128xf32> to vector<2x32xf32>
    %364 = arith.negf %363 : vector<2x32xf32>
    %365 = math.exp %364 : vector<2x32xf32>
    %cst_120 = arith.constant 1.000000e+00 : f32
    %366 = vector.broadcast %cst_120 : f32 to vector<2x32xf32>
    %367 = arith.addf %366, %365 : vector<2x32xf32>
    %368 = arith.divf %366, %367 : vector<2x32xf32>
    %369 = vector.extract_strided_slice %356 {offsets = [0, 64], sizes = [2, 32], strides = [1, 1]} : vector<2x128xf32> to vector<2x32xf32>
    %370 = math.tanh %369 : vector<2x32xf32>
    %371 = vector.extract_strided_slice %356 {offsets = [0, 96], sizes = [2, 32], strides = [1, 1]} : vector<2x128xf32> to vector<2x32xf32>
    %372 = arith.negf %371 : vector<2x32xf32>
    %373 = math.exp %372 : vector<2x32xf32>
    %cst_121 = arith.constant 1.000000e+00 : f32
    %374 = vector.broadcast %cst_121 : f32 to vector<2x32xf32>
    %375 = arith.addf %374, %373 : vector<2x32xf32>
    %376 = arith.divf %374, %375 : vector<2x32xf32>
    %377 = arith.mulf %368, %347 : vector<2x32xf32>
    %378 = arith.mulf %362, %370 : vector<2x32xf32>
    %379 = arith.addf %377, %378 : vector<2x32xf32>
    %380 = math.tanh %379 : vector<2x32xf32>
    %381 = arith.mulf %376, %380 : vector<2x32xf32>
    %c2_i32_122 = arith.constant 2 : i32
    %382 = arith.index_cast %c2_i32_122 : i32 to index
    %c0_123 = arith.constant 0 : index
    %c0_124 = arith.constant 0 : index
    %383 = vector.load %arg12[%382, %c0_123, %c0_124] : memref<8x2x128xf32, #tpu.memory_space<vmem>>, vector<1x2x128xf32>
    %384 = vector.shape_cast %383 : vector<1x2x128xf32> to vector<2x128xf32>
    %385 = arith.truncf %381 : vector<2x32xf32> to vector<2x32xbf16>
    %c0_125 = arith.constant 0 : index
    %c0_126 = arith.constant 0 : index
    %386 = vector.load %arg6[%c0_125, %c0_126] : memref<32x128xbf16, #tpu.memory_space<vmem>>, vector<32x128xbf16>
    %cst_127 = arith.constant dense<0.000000e+00> : vector<2x128xf32>
    %387 = tpu.matmul %385, %386, %cst_127 {dimension_numbers = #tpu.dot_dimension_numbers<[1], [0], [0], [1], [0, 0, 1, 1], [], []>} : vector<2x32xbf16>, vector<32x128xbf16>, vector<2x128xf32> -> vector<2x128xf32>
    %388 = arith.addf %384, %387 : vector<2x128xf32>
    %389 = vector.extract_strided_slice %388 {offsets = [0, 0], sizes = [2, 32], strides = [1, 1]} : vector<2x128xf32> to vector<2x32xf32>
    %390 = arith.negf %389 : vector<2x32xf32>
    %391 = math.exp %390 : vector<2x32xf32>
    %cst_128 = arith.constant 1.000000e+00 : f32
    %392 = vector.broadcast %cst_128 : f32 to vector<2x32xf32>
    %393 = arith.addf %392, %391 : vector<2x32xf32>
    %394 = arith.divf %392, %393 : vector<2x32xf32>
    %395 = vector.extract_strided_slice %388 {offsets = [0, 32], sizes = [2, 32], strides = [1, 1]} : vector<2x128xf32> to vector<2x32xf32>
    %396 = arith.negf %395 : vector<2x32xf32>
    %397 = math.exp %396 : vector<2x32xf32>
    %cst_129 = arith.constant 1.000000e+00 : f32
    %398 = vector.broadcast %cst_129 : f32 to vector<2x32xf32>
    %399 = arith.addf %398, %397 : vector<2x32xf32>
    %400 = arith.divf %398, %399 : vector<2x32xf32>
    %401 = vector.extract_strided_slice %388 {offsets = [0, 64], sizes = [2, 32], strides = [1, 1]} : vector<2x128xf32> to vector<2x32xf32>
    %402 = math.tanh %401 : vector<2x32xf32>
    %403 = vector.extract_strided_slice %388 {offsets = [0, 96], sizes = [2, 32], strides = [1, 1]} : vector<2x128xf32> to vector<2x32xf32>
    %404 = arith.negf %403 : vector<2x32xf32>
    %405 = math.exp %404 : vector<2x32xf32>
    %cst_130 = arith.constant 1.000000e+00 : f32
    %406 = vector.broadcast %cst_130 : f32 to vector<2x32xf32>
    %407 = arith.addf %406, %405 : vector<2x32xf32>
    %408 = arith.divf %406, %407 : vector<2x32xf32>
    %409 = arith.mulf %400, %379 : vector<2x32xf32>
    %410 = arith.mulf %394, %402 : vector<2x32xf32>
    %411 = arith.addf %409, %410 : vector<2x32xf32>
    %412 = math.tanh %411 : vector<2x32xf32>
    %413 = arith.mulf %408, %412 : vector<2x32xf32>
    %c3_i32_131 = arith.constant 3 : i32
    %414 = arith.index_cast %c3_i32_131 : i32 to index
    %c0_132 = arith.constant 0 : index
    %c0_133 = arith.constant 0 : index
    %415 = vector.load %arg12[%414, %c0_132, %c0_133] : memref<8x2x128xf32, #tpu.memory_space<vmem>>, vector<1x2x128xf32>
    %416 = vector.shape_cast %415 : vector<1x2x128xf32> to vector<2x128xf32>
    %417 = arith.truncf %413 : vector<2x32xf32> to vector<2x32xbf16>
    %c0_134 = arith.constant 0 : index
    %c0_135 = arith.constant 0 : index
    %418 = vector.load %arg6[%c0_134, %c0_135] : memref<32x128xbf16, #tpu.memory_space<vmem>>, vector<32x128xbf16>
    %cst_136 = arith.constant dense<0.000000e+00> : vector<2x128xf32>
    %419 = tpu.matmul %417, %418, %cst_136 {dimension_numbers = #tpu.dot_dimension_numbers<[1], [0], [0], [1], [0, 0, 1, 1], [], []>} : vector<2x32xbf16>, vector<32x128xbf16>, vector<2x128xf32> -> vector<2x128xf32>
    %420 = arith.addf %416, %419 : vector<2x128xf32>
    %421 = vector.extract_strided_slice %420 {offsets = [0, 0], sizes = [2, 32], strides = [1, 1]} : vector<2x128xf32> to vector<2x32xf32>
    %422 = arith.negf %421 : vector<2x32xf32>
    %423 = math.exp %422 : vector<2x32xf32>
    %cst_137 = arith.constant 1.000000e+00 : f32
    %424 = vector.broadcast %cst_137 : f32 to vector<2x32xf32>
    %425 = arith.addf %424, %423 : vector<2x32xf32>
    %426 = arith.divf %424, %425 : vector<2x32xf32>
    %427 = vector.extract_strided_slice %420 {offsets = [0, 32], sizes = [2, 32], strides = [1, 1]} : vector<2x128xf32> to vector<2x32xf32>
    %428 = arith.negf %427 : vector<2x32xf32>
    %429 = math.exp %428 : vector<2x32xf32>
    %cst_138 = arith.constant 1.000000e+00 : f32
    %430 = vector.broadcast %cst_138 : f32 to vector<2x32xf32>
    %431 = arith.addf %430, %429 : vector<2x32xf32>
    %432 = arith.divf %430, %431 : vector<2x32xf32>
    %433 = vector.extract_strided_slice %420 {offsets = [0, 64], sizes = [2, 32], strides = [1, 1]} : vector<2x128xf32> to vector<2x32xf32>
    %434 = math.tanh %433 : vector<2x32xf32>
    %435 = vector.extract_strided_slice %420 {offsets = [0, 96], sizes = [2, 32], strides = [1, 1]} : vector<2x128xf32> to vector<2x32xf32>
    %436 = arith.negf %435 : vector<2x32xf32>
    %437 = math.exp %436 : vector<2x32xf32>
    %cst_139 = arith.constant 1.000000e+00 : f32
    %438 = vector.broadcast %cst_139 : f32 to vector<2x32xf32>
    %439 = arith.addf %438, %437 : vector<2x32xf32>
    %440 = arith.divf %438, %439 : vector<2x32xf32>
    %441 = arith.mulf %432, %411 : vector<2x32xf32>
    %442 = arith.mulf %426, %434 : vector<2x32xf32>
    %443 = arith.addf %441, %442 : vector<2x32xf32>
    %444 = math.tanh %443 : vector<2x32xf32>
    %445 = arith.mulf %440, %444 : vector<2x32xf32>
    %c4_i32_140 = arith.constant 4 : i32
    %446 = arith.index_cast %c4_i32_140 : i32 to index
    %c0_141 = arith.constant 0 : index
    %c0_142 = arith.constant 0 : index
    %447 = vector.load %arg12[%446, %c0_141, %c0_142] : memref<8x2x128xf32, #tpu.memory_space<vmem>>, vector<1x2x128xf32>
    %448 = vector.shape_cast %447 : vector<1x2x128xf32> to vector<2x128xf32>
    %449 = arith.truncf %445 : vector<2x32xf32> to vector<2x32xbf16>
    %c0_143 = arith.constant 0 : index
    %c0_144 = arith.constant 0 : index
    %450 = vector.load %arg6[%c0_143, %c0_144] : memref<32x128xbf16, #tpu.memory_space<vmem>>, vector<32x128xbf16>
    %cst_145 = arith.constant dense<0.000000e+00> : vector<2x128xf32>
    %451 = tpu.matmul %449, %450, %cst_145 {dimension_numbers = #tpu.dot_dimension_numbers<[1], [0], [0], [1], [0, 0, 1, 1], [], []>} : vector<2x32xbf16>, vector<32x128xbf16>, vector<2x128xf32> -> vector<2x128xf32>
    %452 = arith.addf %448, %451 : vector<2x128xf32>
    %453 = vector.extract_strided_slice %452 {offsets = [0, 0], sizes = [2, 32], strides = [1, 1]} : vector<2x128xf32> to vector<2x32xf32>
    %454 = arith.negf %453 : vector<2x32xf32>
    %455 = math.exp %454 : vector<2x32xf32>
    %cst_146 = arith.constant 1.000000e+00 : f32
    %456 = vector.broadcast %cst_146 : f32 to vector<2x32xf32>
    %457 = arith.addf %456, %455 : vector<2x32xf32>
    %458 = arith.divf %456, %457 : vector<2x32xf32>
    %459 = vector.extract_strided_slice %452 {offsets = [0, 32], sizes = [2, 32], strides = [1, 1]} : vector<2x128xf32> to vector<2x32xf32>
    %460 = arith.negf %459 : vector<2x32xf32>
    %461 = math.exp %460 : vector<2x32xf32>
    %cst_147 = arith.constant 1.000000e+00 : f32
    %462 = vector.broadcast %cst_147 : f32 to vector<2x32xf32>
    %463 = arith.addf %462, %461 : vector<2x32xf32>
    %464 = arith.divf %462, %463 : vector<2x32xf32>
    %465 = vector.extract_strided_slice %452 {offsets = [0, 64], sizes = [2, 32], strides = [1, 1]} : vector<2x128xf32> to vector<2x32xf32>
    %466 = math.tanh %465 : vector<2x32xf32>
    %467 = vector.extract_strided_slice %452 {offsets = [0, 96], sizes = [2, 32], strides = [1, 1]} : vector<2x128xf32> to vector<2x32xf32>
    %468 = arith.negf %467 : vector<2x32xf32>
    %469 = math.exp %468 : vector<2x32xf32>
    %cst_148 = arith.constant 1.000000e+00 : f32
    %470 = vector.broadcast %cst_148 : f32 to vector<2x32xf32>
    %471 = arith.addf %470, %469 : vector<2x32xf32>
    %472 = arith.divf %470, %471 : vector<2x32xf32>
    %473 = arith.mulf %464, %443 : vector<2x32xf32>
    %474 = arith.mulf %458, %466 : vector<2x32xf32>
    %475 = arith.addf %473, %474 : vector<2x32xf32>
    %476 = math.tanh %475 : vector<2x32xf32>
    %477 = arith.mulf %472, %476 : vector<2x32xf32>
    %c5_i32_149 = arith.constant 5 : i32
    %478 = arith.index_cast %c5_i32_149 : i32 to index
    %c0_150 = arith.constant 0 : index
    %c0_151 = arith.constant 0 : index
    %479 = vector.load %arg12[%478, %c0_150, %c0_151] : memref<8x2x128xf32, #tpu.memory_space<vmem>>, vector<1x2x128xf32>
    %480 = vector.shape_cast %479 : vector<1x2x128xf32> to vector<2x128xf32>
    %481 = arith.truncf %477 : vector<2x32xf32> to vector<2x32xbf16>
    %c0_152 = arith.constant 0 : index
    %c0_153 = arith.constant 0 : index
    %482 = vector.load %arg6[%c0_152, %c0_153] : memref<32x128xbf16, #tpu.memory_space<vmem>>, vector<32x128xbf16>
    %cst_154 = arith.constant dense<0.000000e+00> : vector<2x128xf32>
    %483 = tpu.matmul %481, %482, %cst_154 {dimension_numbers = #tpu.dot_dimension_numbers<[1], [0], [0], [1], [0, 0, 1, 1], [], []>} : vector<2x32xbf16>, vector<32x128xbf16>, vector<2x128xf32> -> vector<2x128xf32>
    %484 = arith.addf %480, %483 : vector<2x128xf32>
    %485 = vector.extract_strided_slice %484 {offsets = [0, 0], sizes = [2, 32], strides = [1, 1]} : vector<2x128xf32> to vector<2x32xf32>
    %486 = arith.negf %485 : vector<2x32xf32>
    %487 = math.exp %486 : vector<2x32xf32>
    %cst_155 = arith.constant 1.000000e+00 : f32
    %488 = vector.broadcast %cst_155 : f32 to vector<2x32xf32>
    %489 = arith.addf %488, %487 : vector<2x32xf32>
    %490 = arith.divf %488, %489 : vector<2x32xf32>
    %491 = vector.extract_strided_slice %484 {offsets = [0, 32], sizes = [2, 32], strides = [1, 1]} : vector<2x128xf32> to vector<2x32xf32>
    %492 = arith.negf %491 : vector<2x32xf32>
    %493 = math.exp %492 : vector<2x32xf32>
    %cst_156 = arith.constant 1.000000e+00 : f32
    %494 = vector.broadcast %cst_156 : f32 to vector<2x32xf32>
    %495 = arith.addf %494, %493 : vector<2x32xf32>
    %496 = arith.divf %494, %495 : vector<2x32xf32>
    %497 = vector.extract_strided_slice %484 {offsets = [0, 64], sizes = [2, 32], strides = [1, 1]} : vector<2x128xf32> to vector<2x32xf32>
    %498 = math.tanh %497 : vector<2x32xf32>
    %499 = vector.extract_strided_slice %484 {offsets = [0, 96], sizes = [2, 32], strides = [1, 1]} : vector<2x128xf32> to vector<2x32xf32>
    %500 = arith.negf %499 : vector<2x32xf32>
    %501 = math.exp %500 : vector<2x32xf32>
    %cst_157 = arith.constant 1.000000e+00 : f32
    %502 = vector.broadcast %cst_157 : f32 to vector<2x32xf32>
    %503 = arith.addf %502, %501 : vector<2x32xf32>
    %504 = arith.divf %502, %503 : vector<2x32xf32>
    %505 = arith.mulf %496, %475 : vector<2x32xf32>
    %506 = arith.mulf %490, %498 : vector<2x32xf32>
    %507 = arith.addf %505, %506 : vector<2x32xf32>
    %508 = math.tanh %507 : vector<2x32xf32>
    %509 = arith.mulf %504, %508 : vector<2x32xf32>
    %c6_i32_158 = arith.constant 6 : i32
    %510 = arith.index_cast %c6_i32_158 : i32 to index
    %c0_159 = arith.constant 0 : index
    %c0_160 = arith.constant 0 : index
    %511 = vector.load %arg12[%510, %c0_159, %c0_160] : memref<8x2x128xf32, #tpu.memory_space<vmem>>, vector<1x2x128xf32>
    %512 = vector.shape_cast %511 : vector<1x2x128xf32> to vector<2x128xf32>
    %513 = arith.truncf %509 : vector<2x32xf32> to vector<2x32xbf16>
    %c0_161 = arith.constant 0 : index
    %c0_162 = arith.constant 0 : index
    %514 = vector.load %arg6[%c0_161, %c0_162] : memref<32x128xbf16, #tpu.memory_space<vmem>>, vector<32x128xbf16>
    %cst_163 = arith.constant dense<0.000000e+00> : vector<2x128xf32>
    %515 = tpu.matmul %513, %514, %cst_163 {dimension_numbers = #tpu.dot_dimension_numbers<[1], [0], [0], [1], [0, 0, 1, 1], [], []>} : vector<2x32xbf16>, vector<32x128xbf16>, vector<2x128xf32> -> vector<2x128xf32>
    %516 = arith.addf %512, %515 : vector<2x128xf32>
    %517 = vector.extract_strided_slice %516 {offsets = [0, 0], sizes = [2, 32], strides = [1, 1]} : vector<2x128xf32> to vector<2x32xf32>
    %518 = arith.negf %517 : vector<2x32xf32>
    %519 = math.exp %518 : vector<2x32xf32>
    %cst_164 = arith.constant 1.000000e+00 : f32
    %520 = vector.broadcast %cst_164 : f32 to vector<2x32xf32>
    %521 = arith.addf %520, %519 : vector<2x32xf32>
    %522 = arith.divf %520, %521 : vector<2x32xf32>
    %523 = vector.extract_strided_slice %516 {offsets = [0, 32], sizes = [2, 32], strides = [1, 1]} : vector<2x128xf32> to vector<2x32xf32>
    %524 = arith.negf %523 : vector<2x32xf32>
    %525 = math.exp %524 : vector<2x32xf32>
    %cst_165 = arith.constant 1.000000e+00 : f32
    %526 = vector.broadcast %cst_165 : f32 to vector<2x32xf32>
    %527 = arith.addf %526, %525 : vector<2x32xf32>
    %528 = arith.divf %526, %527 : vector<2x32xf32>
    %529 = vector.extract_strided_slice %516 {offsets = [0, 64], sizes = [2, 32], strides = [1, 1]} : vector<2x128xf32> to vector<2x32xf32>
    %530 = math.tanh %529 : vector<2x32xf32>
    %531 = vector.extract_strided_slice %516 {offsets = [0, 96], sizes = [2, 32], strides = [1, 1]} : vector<2x128xf32> to vector<2x32xf32>
    %532 = arith.negf %531 : vector<2x32xf32>
    %533 = math.exp %532 : vector<2x32xf32>
    %cst_166 = arith.constant 1.000000e+00 : f32
    %534 = vector.broadcast %cst_166 : f32 to vector<2x32xf32>
    %535 = arith.addf %534, %533 : vector<2x32xf32>
    %536 = arith.divf %534, %535 : vector<2x32xf32>
    %537 = arith.mulf %528, %507 : vector<2x32xf32>
    %538 = arith.mulf %522, %530 : vector<2x32xf32>
    %539 = arith.addf %537, %538 : vector<2x32xf32>
    %540 = math.tanh %539 : vector<2x32xf32>
    %541 = arith.mulf %536, %540 : vector<2x32xf32>
    %c7_i32_167 = arith.constant 7 : i32
    %542 = arith.index_cast %c7_i32_167 : i32 to index
    %c0_168 = arith.constant 0 : index
    %c0_169 = arith.constant 0 : index
    %543 = vector.load %arg12[%542, %c0_168, %c0_169] : memref<8x2x128xf32, #tpu.memory_space<vmem>>, vector<1x2x128xf32>
    %544 = vector.shape_cast %543 : vector<1x2x128xf32> to vector<2x128xf32>
    %545 = arith.truncf %541 : vector<2x32xf32> to vector<2x32xbf16>
    %c0_170 = arith.constant 0 : index
    %c0_171 = arith.constant 0 : index
    %546 = vector.load %arg6[%c0_170, %c0_171] : memref<32x128xbf16, #tpu.memory_space<vmem>>, vector<32x128xbf16>
    %cst_172 = arith.constant dense<0.000000e+00> : vector<2x128xf32>
    %547 = tpu.matmul %545, %546, %cst_172 {dimension_numbers = #tpu.dot_dimension_numbers<[1], [0], [0], [1], [0, 0, 1, 1], [], []>} : vector<2x32xbf16>, vector<32x128xbf16>, vector<2x128xf32> -> vector<2x128xf32>
    %548 = arith.addf %544, %547 : vector<2x128xf32>
    %549 = vector.extract_strided_slice %548 {offsets = [0, 0], sizes = [2, 32], strides = [1, 1]} : vector<2x128xf32> to vector<2x32xf32>
    %550 = arith.negf %549 : vector<2x32xf32>
    %551 = math.exp %550 : vector<2x32xf32>
    %cst_173 = arith.constant 1.000000e+00 : f32
    %552 = vector.broadcast %cst_173 : f32 to vector<2x32xf32>
    %553 = arith.addf %552, %551 : vector<2x32xf32>
    %554 = arith.divf %552, %553 : vector<2x32xf32>
    %555 = vector.extract_strided_slice %548 {offsets = [0, 32], sizes = [2, 32], strides = [1, 1]} : vector<2x128xf32> to vector<2x32xf32>
    %556 = arith.negf %555 : vector<2x32xf32>
    %557 = math.exp %556 : vector<2x32xf32>
    %cst_174 = arith.constant 1.000000e+00 : f32
    %558 = vector.broadcast %cst_174 : f32 to vector<2x32xf32>
    %559 = arith.addf %558, %557 : vector<2x32xf32>
    %560 = arith.divf %558, %559 : vector<2x32xf32>
    %561 = vector.extract_strided_slice %548 {offsets = [0, 64], sizes = [2, 32], strides = [1, 1]} : vector<2x128xf32> to vector<2x32xf32>
    %562 = math.tanh %561 : vector<2x32xf32>
    %563 = vector.extract_strided_slice %548 {offsets = [0, 96], sizes = [2, 32], strides = [1, 1]} : vector<2x128xf32> to vector<2x32xf32>
    %564 = arith.negf %563 : vector<2x32xf32>
    %565 = math.exp %564 : vector<2x32xf32>
    %cst_175 = arith.constant 1.000000e+00 : f32
    %566 = vector.broadcast %cst_175 : f32 to vector<2x32xf32>
    %567 = arith.addf %566, %565 : vector<2x32xf32>
    %568 = arith.divf %566, %567 : vector<2x32xf32>
    %569 = arith.mulf %560, %539 : vector<2x32xf32>
    %570 = arith.mulf %554, %562 : vector<2x32xf32>
    %571 = arith.addf %569, %570 : vector<2x32xf32>
    %572 = math.tanh %571 : vector<2x32xf32>
    %573 = arith.mulf %568, %572 : vector<2x32xf32>
    %c8_i32_176 = arith.constant 8 : i32
    %574 = arith.truncf %573 : vector<2x32xf32> to vector<2x32xbf16>
    %c0_177 = arith.constant 0 : index
    %c0_178 = arith.constant 0 : index
    %575 = vector.load %arg8[%c0_177, %c0_178] : memref<32x8xbf16, #tpu.memory_space<vmem>>, vector<32x8xbf16>
    %cst_179 = arith.constant dense<0.000000e+00> : vector<2x8xf32>
    %576 = tpu.matmul %574, %575, %cst_179 {dimension_numbers = #tpu.dot_dimension_numbers<[1], [0], [0], [1], [0, 0, 1, 1], [], []>} : vector<2x32xbf16>, vector<32x8xbf16>, vector<2x8xf32> -> vector<2x8xf32>
    %c0_180 = arith.constant 0 : index
    %c0_181 = arith.constant 0 : index
    %577 = vector.load %arg9[%c0_180, %c0_181] : memref<1x8xf32, #tpu.memory_space<vmem>>, vector<1x8xf32>
    %578 = vector.broadcast %577 : vector<1x8xf32> to vector<2x8xf32>
    %579 = arith.addf %576, %578 : vector<2x8xf32>
    %c0_182 = arith.constant 0 : index
    %c0_183 = arith.constant 0 : index
    %580 = vector.load %arg10[%c0_182, %c0_183] : memref<2x8xf32, #tpu.memory_space<vmem>>, vector<2x8xf32>
    tpu.vector_store %arg10[%c0_182, %c0_183], %579 {strides = array<i32>} : memref<2x8xf32, #tpu.memory_space<vmem>>, vector<2x8xf32>,
    return
  }
  func.func @transform_0(%arg0: i32) -> (i32, i32, i32) {
    %c0_i32 = arith.constant 0 : i32
    %c0_i32_0 = arith.constant 0 : i32
    %c0_i32_1 = arith.constant 0 : i32
    %c0_i32_2 = arith.constant 0 : i32
    return %c0_i32, %c0_i32_0, %c0_i32_1 : i32, i32, i32
  }
  func.func @transform_1(%arg0: i32) -> (i32, i32) {
    %c0_i32 = arith.constant 0 : i32
    %c0_i32_0 = arith.constant 0 : i32
    %c0_i32_1 = arith.constant 0 : i32
    return %c0_i32, %c0_i32_0 : i32, i32
  }
  func.func @transform_2(%arg0: i32) -> (i32, i32) {
    %c0_i32 = arith.constant 0 : i32
    %c0_i32_0 = arith.constant 0 : i32
    %c0_i32_1 = arith.constant 0 : i32
    return %c0_i32, %c0_i32_0 : i32, i32
  }
  func.func @transform_3(%arg0: i32) -> (i32, i32) {
    %c0_i32 = arith.constant 0 : i32
    %c0_i32_0 = arith.constant 0 : i32
    %c0_i32_1 = arith.constant 0 : i32
    return %c0_i32, %c0_i32_0 : i32, i32
  }
  func.func @transform_4(%arg0: i32) -> (i32, i32) {
    %c0_i32 = arith.constant 0 : i32
    %c0_i32_0 = arith.constant 0 : i32
    %c0_i32_1 = arith.constant 0 : i32
    return %c0_i32, %c0_i32_0 : i32, i32
  }
  func.func @transform_5(%arg0: i32) -> (i32, i32) {
    %c0_i32 = arith.constant 0 : i32
    %c0_i32_0 = arith.constant 0 : i32
    %c0_i32_1 = arith.constant 0 : i32
    return %c0_i32, %c0_i32_0 : i32, i32
  }
  func.func @transform_6(%arg0: i32) -> (i32, i32) {
    %c0_i32 = arith.constant 0 : i32
    %c0_i32_0 = arith.constant 0 : i32
    %c0_i32_1 = arith.constant 0 : i32
    return %c0_i32, %c0_i32_0 : i32, i32
  }
  func.func @transform_7(%arg0: i32) -> (i32, i32) {
    %c0_i32 = arith.constant 0 : i32
    %c0_i32_0 = arith.constant 0 : i32
    %c0_i32_1 = arith.constant 0 : i32
    return %c0_i32, %c0_i32_0 : i32, i32
  }
  func.func @transform_8(%arg0: i32) -> (i32, i32) {
    %c0_i32 = arith.constant 0 : i32
    %c0_i32_0 = arith.constant 0 : i32
    %c0_i32_1 = arith.constant 0 : i32
    return %c0_i32, %c0_i32_0 : i32, i32
  }
  func.func @transform_9(%arg0: i32) -> (i32, i32) {
    %c0_i32 = arith.constant 0 : i32
    %c0_i32_0 = arith.constant 0 : i32
    %c0_i32_1 = arith.constant 0 : i32
    return %c0_i32, %c0_i32_0 : i32, i32
  }
}

</mosaic_0001>

<llo_original>
// kernel: lstm_model_forward.1
$region0: #{lstm_model_forward.1}
  #allocation0 [shape = 'u32[]', space=smem, size = 0x4, offset = 0x4, fixed_abs, tag = 'smem constant byte address 0x4 - core index']
  #allocation1 [shape = 'u32[144,128]{1,0:T(1,128)}', space=vmem, size = 0x12000, scoped, tag = 'internal scratch']
  #allocation2 [shape = 'bf16[8,2,32]{2,1,0:T(2,128)(2,1)}', space=vmem, size = 0x1000, scoped, tag = 'scratch operand']
  #allocation3 [shape = 'f32[8,2,128]{2,1,0:T(2,128)}', space=vmem, size = 0x2000, scoped, tag = 'scratch operand']
  %s0 = inlined_call_operand.vmem [shape: bf16[8,2,16], index: 0, kind: input, shape index: {}]
  %s1 = inlined_call_operand.vmem [shape: bf16[16,128], index: 1, kind: input, shape index: {}]
  %s2 = inlined_call_operand.vmem [shape: bf16[32,128], index: 2, kind: input, shape index: {}]
  %s3 = inlined_call_operand.vmem [shape: f32[1,128], index: 3, kind: input, shape index: {}]
  %s4 = inlined_call_operand.vmem [shape: bf16[32,128], index: 4, kind: input, shape index: {}]
  %s5 = inlined_call_operand.vmem [shape: bf16[32,128], index: 5, kind: input, shape index: {}]
  %s6 = inlined_call_operand.vmem [shape: f32[1,128], index: 6, kind: input, shape index: {}]
  %s7 = inlined_call_operand.vmem [shape: bf16[32,8], index: 7, kind: input, shape index: {}]
  %s8 = inlined_call_operand.hbm [shape: f32[1,8], index: 8, kind: input, shape index: {}]
  %s9 = inlined_call_operand.hbm [shape: f32[2,8], index: 9, kind: output, shape index: {}]
  %s10 = sld [smem:[#allocation0]]
  $region50: #{lstm_model_forward.1} parent=0
    _
  %s12 = ssub.s32 1, %s10
  %s13 = scalar_select 0, %s12, %s10
  $region1: #{lstm_model_forward.1} parent=0
    #allocation4 [shape = 'u8[512]{0}', space=vmem, size = 0x400, scoped, tag = 'input window, operand 8, single buffered']
    #allocation5 [shape = 's32[1]{0}', space=sflag, size = 0x4, scoped, tag = 'scoped memory for lstm_model_forward.1']
    #allocation6 [shape = 's32[1]{0}', space=sflag, size = 0x4, scoped, tag = 'scoped memory for lstm_model_forward.1']
    #allocation7 [shape = 'u8[1024]{0}', space=vmem, size = 0x400, scoped, tag = 'output window, operand 0, single buffered']
    %14 = vsyncpa [#allocation5], 0
    %15 = vsyncpa [#allocation6], 0
    // Predicated region
    $region2: #{lstm_model_forward.1} parent=1 // pred_check
      _
    $region3: #{lstm_model_forward.1} parent=1 // pred_check_branch
      %17 = sbr.rel (0) target = $region5
    $region4: #{lstm_model_forward.1} parent=1 // pred_region
      _
    $region5: #{lstm_model_forward.1} parent=1 // pred_fallthru
      _
    // Predicated region
    $region6: #{lstm_model_forward.1} parent=1 // pred_check
      _
    $region7: #{lstm_model_forward.1} parent=1 // pred_check_branch
      %19 = sbr.rel (0) target = $region9
    $region8: #{lstm_model_forward.1} parent=1 // pred_region
      _
    $region9: #{lstm_model_forward.1} parent=1 // pred_fallthru
      _
    // Predicated region
    $region10: #{lstm_model_forward.1} parent=1 // pred_check
      _
    $region11: #{lstm_model_forward.1} parent=1 // pred_check_branch
      %21 = sbr.rel (0) target = $region13
    $region12: #{lstm_model_forward.1} parent=1 // pred_region
      _
    $region13: #{lstm_model_forward.1} parent=1 // pred_fallthru
      _
    // Predicated region
    $region14: #{lstm_model_forward.1} parent=1 // pred_check
      _
    $region15: #{lstm_model_forward.1} parent=1 // pred_check_branch
      %23 = sbr.rel (0) target = $region17
    $region16: #{lstm_model_forward.1} parent=1 // pred_region
      _
    $region17: #{lstm_model_forward.1} parent=1 // pred_fallthru
      _
    // Predicated region
    $region18: #{lstm_model_forward.1} parent=1 // pred_check
      _
    $region19: #{lstm_model_forward.1} parent=1 // pred_check_branch
      %25 = sbr.rel (0) target = $region21
    $region20: #{lstm_model_forward.1} parent=1 // pred_region
      _
    $region21: #{lstm_model_forward.1} parent=1 // pred_fallthru
      _
    // Predicated region
    $region22: #{lstm_model_forward.1} parent=1 // pred_check
      _
    $region23: #{lstm_model_forward.1} parent=1 // pred_check_branch
      %27 = sbr.rel (0) target = $region25
    $region24: #{lstm_model_forward.1} parent=1 // pred_region
      _
    $region25: #{lstm_model_forward.1} parent=1 // pred_fallthru
      _
    // Predicated region
    $region26: #{lstm_model_forward.1} parent=1 // pred_check
      _
    $region27: #{lstm_model_forward.1} parent=1 // pred_check_branch
      %29 = sbr.rel (0) target = $region29
    $region28: #{lstm_model_forward.1} parent=1 // pred_region
      _
    $region29: #{lstm_model_forward.1} parent=1 // pred_fallthru
      _
    // Predicated region
    $region30: #{lstm_model_forward.1} parent=1 // pred_check
      _
    $region31: #{lstm_model_forward.1} parent=1 // pred_check_branch
      %31 = sbr.rel (0) target = $region33
    $region32: #{lstm_model_forward.1} parent=1 // pred_region
      _
    $region33: #{lstm_model_forward.1} parent=1 // pred_fallthru
      _
    // Predicated region
    $region34: #{lstm_model_forward.1} parent=1 // pred_check
      _
    $region35: #{lstm_model_forward.1} parent=1 // pred_check_branch
      %33 = sbr.rel (0) target = $region37
    $region36: #{lstm_model_forward.1} parent=1 // pred_region
      %s35 = ssub.s32 16, 16
      %36 = vsyncadd [#allocation5], %s35
      %s38 = sshll.u32 [#allocation4], 4
      %s39 = int_to_ptr.vmem [resolvable:$true] %s38
      %41 = dma.hbm_to_vmem [thread:$0]  %s8, 16, %s39, [#allocation5]
    $region37: #{lstm_model_forward.1} parent=1 // pred_fallthru
      _
    // Predicated region
    $region38: #{lstm_model_forward.1} parent=1 // pred_check
      _
    $region39: #{lstm_model_forward.1} parent=1 // pred_check_branch
      %43 = sbr.rel (0) target = $region41
    $region40: #{lstm_model_forward.1} parent=1 // pred_region
      %44 = dma.done [#allocation5], 16
    $region41: #{lstm_model_forward.1} parent=1 // pred_fallthru
      _
    %v46 = vld [vmem:[%s0] sm:$0x1]
    %v47 = vld [vmem:[%s0 + $0x1] sm:$0x1]
    %v48 = vld [vmem:[%s0 + $0x2] sm:$0x1]
    %v49 = vld [vmem:[%s0 + $0x3] sm:$0x1]
    %v50 = vld [vmem:[%s0 + $0x4] sm:$0x1]
    %v51 = vld [vmem:[%s0 + $0x5] sm:$0x1]
    %v52 = vld [vmem:[%s0 + $0x6] sm:$0x1]
    %v53 = vld [vmem:[%s0 + $0x7] sm:$0x1]
    %v54 = vld [vmem:[%s1] sm:$0xf]
    %v55 = vld [vmem:[%s1 + $0x4] sm:$0xf]
    %v56 = vld [vmem:[%s3] sm:$0x1]
    %v58 = vlaneseq
    %v59 = vshrl.u32 %v58, 7
    %v60 = vsub.s32 0, %v59
    %v61 = vrot.slane %v56, %v60
    %v71 = vcombine.low %v46, %v47
    %v72 = vcombine.low %v48, %v49
    %v73 = vcombine.low %v50, %v51
    %v74 = vcombine.low %v52, %v53
    %v76 = vunpack.c.l.s4 1966171168
    %v77 = vunpack.c.0.s8 %v76
    %v78 = vlaneseq
    %v79 = vshrl.u32 %v78, 7
    %v80 = vsub.s32 %v77, %v79
    %v81 = vrot.slane %v71, %v80
    %v83 = vunpack.c.l.s4 1966171168
    %v84 = vunpack.c.0.s8 %v83
    %v85 = vlaneseq
    %v86 = vshrl.u32 %v85, 7
    %v87 = vsub.s32 %v84, %v86
    %v88 = vrot.slane %v72, %v87
    %v90 = vunpack.c.l.s4 1966171168
    %v91 = vunpack.c.0.s8 %v90
    %v92 = vlaneseq
    %v93 = vshrl.u32 %v92, 7
    %v94 = vsub.s32 %v91, %v93
    %v95 = vrot.slane %v73, %v94
    %v97 = vunpack.c.l.s4 1966171168
    %v98 = vunpack.c.0.s8 %v97
    %v99 = vlaneseq
    %v100 = vshrl.u32 %v99, 7
    %v101 = vsub.s32 %v98, %v100
    %v102 = vrot.slane %v74, %v101
    %v103 = vcombine.low %v81, %v88
    %v104 = vcombine.low %v95, %v102
    %v106 = vunpack.c.l.s4 1966171168
    %v107 = vunpack.c.0.s8 %v106
    %v108 = vlaneseq
    %v109 = vshrl.u32 %v108, 7
    %v110 = vsub.s32 %v107, %v109
    %v111 = vrot.slane %v103, %v110
    %v113 = vunpack.c.l.s4 1966171168
    %v114 = vunpack.c.0.s8 %v113
    %v115 = vlaneseq
    %v116 = vshrl.u32 %v115, 7
    %v117 = vsub.s32 %v114, %v116
    %v118 = vrot.slane %v104, %v117
    %v119 = vcombine.low %v111, %v118
    %v122 = vunpack.c.l.b16 %v54
    %v123 = vunpack.c.l.b16 %v55
    %v124 = vpack.c.b16 %v123, %v122
    %vm126 = vcmask 130048
    %v128 = vsel %vm126, %v119, 0
    %130 = vmatprep.subr.bf16.mxu0 0
    %131 = vmatpush1.bf16.msra.mxu0 %v124
    %132 = vmatprep.subr.bf16.mxu0 0
    %133 = vmatpush1.bf16.msra.mxu0 0
    %134 = vmatprep.subr.bf16.mxu0 0
    %135 = vmatpush1.bf16.msra.mxu0 0
    %136 = vmatprep.subr.bf16.mxu0 0
    %137 = vmatpush1.bf16.msra.mxu0 0
    %138 = vmatprep.subr.bf16.mxu0 0
    %139 = vmatpush1.bf16.msra.mxu0 0
    %140 = vmatprep.subr.bf16.mxu0 0
    %141 = vmatpush1.bf16.msra.mxu0 0
    %142 = vmatprep.subr.bf16.mxu0 0
    %143 = vmatpush1.bf16.msra.mxu0 0
    %144 = vmatprep.subr.bf16.mxu0 0
    %145 = vmatpush1.bf16.msra.mxu0 0
    %146 = vmatprep.subr.bf16.mxu0 0
    %147 = vmatpush1.bf16.msra.mxu0 0
    %148 = vmatprep.subr.bf16.mxu0 0
    %149 = vmatpush1.bf16.msra.mxu0 0
    %150 = vmatprep.subr.bf16.mxu0 0
    %151 = vmatpush1.bf16.msra.mxu0 0
    %152 = vmatprep.subr.bf16.mxu0 0
    %153 = vmatpush1.bf16.msra.mxu0 0
    %154 = vmatprep.subr.bf16.mxu0 0
    %155 = vmatpush1.bf16.msra.mxu0 0
    %156 = vmatprep.subr.bf16.mxu0 0
    %157 = vmatpush1.bf16.msra.mxu0 0
    %158 = vmatprep.subr.bf16.mxu0 0
    %159 = vmatpush1.bf16.msra.mxu0 0
    %160 = vmatprep.subr.bf16.mxu0 0
    %161 = vmatpush1.bf16.msra.mxu0 0
    %162 = vmatprep.mubr.bf16.mxu0 0
    %163 = vmatmul.mubr.bf16.gmra.mrb[0].mxu0 %v128
    %v164 = vpop.f32.mrb[0].mxu0
    %v165 = vadd.f32 %v61, %v164
    %v166 = vpop.f32.mrb[0].mxu0
    %v167 = vpop.f32.mrb[0].mxu0
    %v168 = vadd.f32 %v61, %v167
    %v169 = vpop.f32.mrb[0].mxu0
    %170 = vdwg.mxu0
    %v173 = vcombine.high %v165, %v165
    %v175 = vunpack.c.l.s4 1983009808
    %v176 = vunpack.c.0.s8 %v175
    %v177 = vlaneseq
    %v178 = vshrl.u32 %v177, 7
    %v179 = vsub.s32 %v176, %v178
    %v180 = vrot.slane %v165, %v179
    %v182 = vunpack.c.l.s4 1983009808
    %v183 = vunpack.c.0.s8 %v182
    %v184 = vlaneseq
    %v185 = vshrl.u32 %v184, 7
    %v186 = vsub.s32 %v183, %v185
    %v187 = vrot.slane %v173, %v186
    %v188 = vcombine.high %v180, %v180
    %v189 = vcombine.high %v187, %v187
    %v190 = vcombine.high %v168, %v168
    %v192 = vunpack.c.l.s4 1983009808
    %v193 = vunpack.c.0.s8 %v192
    %v194 = vlaneseq
    %v195 = vshrl.u32 %v194, 7
    %v196 = vsub.s32 %v193, %v195
    %v197 = vrot.slane %v168, %v196
    %v199 = vunpack.c.l.s4 1983009808
    %v200 = vunpack.c.0.s8 %v199
    %v201 = vlaneseq
    %v202 = vshrl.u32 %v201, 7
    %v203 = vsub.s32 %v200, %v202
    %v204 = vrot.slane %v190, %v203
    %v205 = vcombine.high %v197, %v197
    %v206 = vcombine.high %v204, %v204
    %215 = vst [vmem:[#allocation3] sm:$0x3] %v180
    %216 = vst [vmem:[#allocation3 + $0x2] sm:$0x3] %v188
    %217 = vst [vmem:[#allocation3 + $0x4] sm:$0x3] %v187
    %218 = vst [vmem:[#allocation3 + $0x6] sm:$0x3] %v189
    %219 = vst [vmem:[#allocation3 + $0x8] sm:$0x3] %v197
    %220 = vst [vmem:[#allocation3 + $0xa] sm:$0x3] %v205
    %221 = vst [vmem:[#allocation3 + $0xc] sm:$0x3] %v204
    %222 = vst [vmem:[#allocation3 + $0xe] sm:$0x3] %v206
    %v223 = vld [vmem:[#allocation3] sm:$0x3]
    %v224 = vld [vmem:[%s2] sm:$0xf]
    %v225 = vld [vmem:[%s2 + $0x4] sm:$0xf]
    %v226 = vld [vmem:[%s2 + $0x8] sm:$0xf]
    %v227 = vld [vmem:[%s2 + $0xc] sm:$0xf]
    %v232 = vunpack.c.l.b16 %v224
    %v233 = vunpack.c.l.b16 %v225
    %v234 = vunpack.c.l.b16 %v226
    %v235 = vunpack.c.l.b16 %v227
    %v236 = vpack.c.b16 %v233, %v232
    %v237 = vpack.c.b16 %v235, %v234
    %vm240 = vcmask 261120
    %v242 = vsel %vm240, 0, 0
    %244 = vmatprep.subr.bf16.mxu0 0
    %245 = vmatpush1.bf16.msra.mxu0 %v236
    %246 = vmatprep.subr.bf16.mxu0 0
    %247 = vmatpush1.bf16.msra.mxu0 %v237
    %248 = vmatprep.subr.bf16.mxu0 0
    %249 = vmatpush1.bf16.msra.mxu0 0
    %250 = vmatprep.subr.bf16.mxu0 0
    %251 = vmatpush1.bf16.msra.mxu0 0
    %252 = vmatprep.subr.bf16.mxu0 0
    %253 = vmatpush1.bf16.msra.mxu0 0
    %254 = vmatprep.subr.bf16.mxu0 0
    %255 = vmatpush1.bf16.msra.mxu0 0
    %256 = vmatprep.subr.bf16.mxu0 0
    %257 = vmatpush1.bf16.msra.mxu0 0
    %258 = vmatprep.subr.bf16.mxu0 0
    %259 = vmatpush1.bf16.msra.mxu0 0
    %260 = vmatprep.subr.bf16.mxu0 0
    %261 = vmatpush1.bf16.msra.mxu0 0
    %262 = vmatprep.subr.bf16.mxu0 0
    %263 = vmatpush1.bf16.msra.mxu0 0
    %264 = vmatprep.subr.bf16.mxu0 0
    %265 = vmatpush1.bf16.msra.mxu0 0
    %266 = vmatprep.subr.bf16.mxu0 0
    %267 = vmatpush1.bf16.msra.mxu0 0
    %268 = vmatprep.subr.bf16.mxu0 0
    %269 = vmatpush1.bf16.msra.mxu0 0
    %270 = vmatprep.subr.bf16.mxu0 0
    %271 = vmatpush1.bf16.msra.mxu0 0
    %272 = vmatprep.subr.bf16.mxu0 0
    %273 = vmatpush1.bf16.msra.mxu0 0
    %274 = vmatprep.subr.bf16.mxu0 0
    %275 = vmatpush1.bf16.msra.mxu0 0
    %276 = vmatprep.mubr.bf16.mxu0 0
    %277 = vmatmul.mubr.bf16.gmra.mrb[0].mxu0 %v242
    %v278 = vpop.f32.mrb[0].mxu0
    %v279 = vadd.f32 0.0, %v278
    %v280 = vpop.f32.mrb[0].mxu0
    %v281 = vpop.f32.mrb[0].mxu0
    %v282 = vpop.f32.mrb[0].mxu0
    %283 = vdwg.mxu0
    %v284 = vadd.f32 %v223, %v279
    %v285 = vxor.u32 %v284, 2147483648
    %v286 = vmul.f32 %v285, 1.442695
    %v287 = vpow.pop %v286
    %v288 = vadd.f32 %v287, 1.0
    %v289 = vrcp.pop %v288
    %v290 = vmul.f32 1.0, %v289
    %v291 = vtanh.pop %v284
    %v292 = vmul.f32 %v290, 0.0
    %294 = vrot.lane.b32.xlu0 %v291, 64
    %v295 = vpop.permute.xlu0 %294
    %v297 = vmul.f32 %v290, %v295
    %299 = vrot.lane.b32.xlu0 %v297, 32
    %v300 = vpop.permute.xlu0 %299
    %v302 = vadd.f32 %v292, %v300
    %v303 = vtanh.pop %v302
    %305 = vrot.lane.b32.xlu0 %v303, 64
    %v306 = vpop.permute.xlu0 %305
    %v308 = vmul.f32 %v290, %v306
    %v309 = vpack.c.bf16 %v308, %v308
    %v312 = vunpack.c.l.s4 1966171168
    %v313 = vunpack.c.0.s8 %v312
    %v314 = vlaneseq
    %v315 = vshrl.u32 %v314, 7
    %v316 = vsub.s32 %v313, %v315
    %v317 = vrot.slane %v309, %v316
    %v319 = vunpack.c.l.s4 1966171168
    %v320 = vunpack.c.0.s8 %v319
    %v321 = vlaneseq
    %v322 = vshrl.u32 %v321, 7
    %v323 = vsub.s32 %v320, %v322
    %v324 = vrot.slane %v317, %v323
    %325 = vrot.lane.b32.xlu0 %v324, 32
    %v326 = vpop.permute.xlu0 %325
    %vm328 = vcmask 253952
    %329 = vst.msk [vmem:[#allocation2] sm:$0x1] %vm328, %v326
    %s330 = scalar_lea.vmem [#allocation3], 2
    %v331 = vld [vmem:[%s330] sm:$0x3]
    %v332 = vld [vmem:[%s2] sm:$0xf]
    %v333 = vld [vmem:[%s2 + $0x4] sm:$0xf]
    %v334 = vld [vmem:[%s2 + $0x8] sm:$0xf]
    %v335 = vld [vmem:[%s2 + $0xc] sm:$0xf]
    %336 = vrot.lane.b32.xlu0 %v309, 32
    %v337 = vpop.permute.xlu0 %336
    %v342 = vunpack.c.l.b16 %v332
    %v343 = vunpack.c.l.b16 %v333
    %v344 = vunpack.c.l.b16 %v334
    %v345 = vunpack.c.l.b16 %v335
    %v346 = vpack.c.b16 %v343, %v342
    %v347 = vpack.c.b16 %v345, %v344
    %v351 = vsel %vm240, %v337, 0
    %353 = vmatprep.subr.bf16.mxu0 0
    %354 = vmatpush1.bf16.msra.mxu0 %v346
    %355 = vmatprep.subr.bf16.mxu0 0
    %356 = vmatpush1.bf16.msra.mxu0 %v347
    %357 = vmatprep.subr.bf16.mxu0 0
    %358 = vmatpush1.bf16.msra.mxu0 0
    %359 = vmatprep.subr.bf16.mxu0 0
    %360 = vmatpush1.bf16.msra.mxu0 0
    %361 = vmatprep.subr.bf16.mxu0 0
    %362 = vmatpush1.bf16.msra.mxu0 0
    %363 = vmatprep.subr.bf16.mxu0 0
    %364 = vmatpush1.bf16.msra.mxu0 0
    %365 = vmatprep.subr.bf16.mxu0 0
    %366 = vmatpush1.bf16.msra.mxu0 0
    %367 = vmatprep.subr.bf16.mxu0 0
    %368 = vmatpush1.bf16.msra.mxu0 0
    %369 = vmatprep.subr.bf16.mxu0 0
    %370 = vmatpush1.bf16.msra.mxu0 0
    %371 = vmatprep.subr.bf16.mxu0 0
    %372 = vmatpush1.bf16.msra.mxu0 0
    %373 = vmatprep.subr.bf16.mxu0 0
    %374 = vmatpush1.bf16.msra.mxu0 0
    %375 = vmatprep.subr.bf16.mxu0 0
    %376 = vmatpush1.bf16.msra.mxu0 0
    %377 = vmatprep.subr.bf16.mxu0 0
    %378 = vmatpush1.bf16.msra.mxu0 0
    %379 = vmatprep.subr.bf16.mxu0 0
    %380 = vmatpush1.bf16.msra.mxu0 0
    %381 = vmatprep.subr.bf16.mxu0 0
    %382 = vmatpush1.bf16.msra.mxu0 0
    %383 = vmatprep.subr.bf16.mxu0 0
    %384 = vmatpush1.bf16.msra.mxu0 0
    %385 = vmatprep.mubr.bf16.mxu0 0
    %386 = vmatmul.mubr.bf16.gmra.mrb[0].mxu0 %v351
    %v387 = vpop.f32.mrb[0].mxu0
    %v388 = vadd.f32 0.0, %v387
    %v389 = vpop.f32.mrb[0].mxu0
    %v390 = vpop.f32.mrb[0].mxu0
    %v391 = vpop.f32.mrb[0].mxu0
    %392 = vdwg.mxu0
    %v393 = vadd.f32 %v331, %v388
    %v394 = vxor.u32 %v393, 2147483648
    %v395 = vmul.f32 %v394, 1.442695
    %v396 = vpow.pop %v395
    %v397 = vadd.f32 %v396, 1.0
    %v398 = vrcp.pop %v397
    %v399 = vmul.f32 1.0, %v398
    %v400 = vtanh.pop %v393
    %v401 = vmul.f32 %v399, %v302
    %403 = vrot.lane.b32.xlu0 %v400, 64
    %v404 = vpop.permute.xlu0 %403
    %v406 = vmul.f32 %v399, %v404
    %408 = vrot.lane.b32.xlu0 %v406, 32
    %v409 = vpop.permute.xlu0 %408
    %v411 = vadd.f32 %v401, %v409
    %v412 = vtanh.pop %v411
    %414 = vrot.lane.b32.xlu0 %v412, 64
    %v415 = vpop.permute.xlu0 %414
    %v417 = vmul.f32 %v399, %v415
    %v418 = vpack.c.bf16 %v417, %v417
    %v421 = vunpack.c.l.s4 1966171168
    %v422 = vunpack.c.0.s8 %v421
    %v423 = vlaneseq
    %v424 = vshrl.u32 %v423, 7
    %v425 = vsub.s32 %v422, %v424
    %v426 = vrot.slane %v418, %v425
    %v428 = vunpack.c.l.s4 1966171168
    %v429 = vunpack.c.0.s8 %v428
    %v430 = vlaneseq
    %v431 = vshrl.u32 %v430, 7
    %v432 = vsub.s32 %v429, %v431
    %v433 = vrot.slane %v426, %v432
    %434 = vrot.lane.b32.xlu0 %v433, 32
    %v435 = vpop.permute.xlu0 %434
    %s437 = scalar_lea.vmem [#allocation2], 1
    %438 = vst.msk [vmem:[%s437] sm:$0x1] %vm328, %v435
    %s439 = scalar_lea.vmem [#allocation3], 4
    %v440 = vld [vmem:[%s439] sm:$0x3]
    %v441 = vld [vmem:[%s2] sm:$0xf]
    %v442 = vld [vmem:[%s2 + $0x4] sm:$0xf]
    %v443 = vld [vmem:[%s2 + $0x8] sm:$0xf]
    %v444 = vld [vmem:[%s2 + $0xc] sm:$0xf]
    %445 = vrot.lane.b32.xlu0 %v418, 32
    %v446 = vpop.permute.xlu0 %445
    %v451 = vunpack.c.l.b16 %v441
    %v452 = vunpack.c.l.b16 %v442
    %v453 = vunpack.c.l.b16 %v443
    %v454 = vunpack.c.l.b16 %v444
    %v455 = vpack.c.b16 %v452, %v451
    %v456 = vpack.c.b16 %v454, %v453
    %v460 = vsel %vm240, %v446, 0
    %462 = vmatprep.subr.bf16.mxu0 0
    %463 = vmatpush1.bf16.msra.mxu0 %v455
    %464 = vmatprep.subr.bf16.mxu0 0
    %465 = vmatpush1.bf16.msra.mxu0 %v456
    %466 = vmatprep.subr.bf16.mxu0 0
    %467 = vmatpush1.bf16.msra.mxu0 0
    %468 = vmatprep.subr.bf16.mxu0 0
    %469 = vmatpush1.bf16.msra.mxu0 0
    %470 = vmatprep.subr.bf16.mxu0 0
    %471 = vmatpush1.bf16.msra.mxu0 0
    %472 = vmatprep.subr.bf16.mxu0 0
    %473 = vmatpush1.bf16.msra.mxu0 0
    %474 = vmatprep.subr.bf16.mxu0 0
    %475 = vmatpush1.bf16.msra.mxu0 0
    %476 = vmatprep.subr.bf16.mxu0 0
    %477 = vmatpush1.bf16.msra.mxu0 0
    %478 = vmatprep.subr.bf16.mxu0 0
    %479 = vmatpush1.bf16.msra.mxu0 0
    %480 = vmatprep.subr.bf16.mxu0 0
    %481 = vmatpush1.bf16.msra.mxu0 0
    %482 = vmatprep.subr.bf16.mxu0 0
    %483 = vmatpush1.bf16.msra.mxu0 0
    %484 = vmatprep.subr.bf16.mxu0 0
    %485 = vmatpush1.bf16.msra.mxu0 0
    %486 = vmatprep.subr.bf16.mxu0 0
    %487 = vmatpush1.bf16.msra.mxu0 0
    %488 = vmatprep.subr.bf16.mxu0 0
    %489 = vmatpush1.bf16.msra.mxu0 0
    %490 = vmatprep.subr.bf16.mxu0 0
    %491 = vmatpush1.bf16.msra.mxu0 0
    %492 = vmatprep.subr.bf16.mxu0 0
    %493 = vmatpush1.bf16.msra.mxu0 0
    %494 = vmatprep.mubr.bf16.mxu0 0
    %495 = vmatmul.mubr.bf16.gmra.mrb[0].mxu0 %v460
    %v496 = vpop.f32.mrb[0].mxu0
    %v497 = vadd.f32 0.0, %v496
    %v498 = vpop.f32.mrb[0].mxu0
    %v499 = vpop.f32.mrb[0].mxu0
    %v500 = vpop.f32.mrb[0].mxu0
    %501 = vdwg.mxu0
    %v502 = vadd.f32 %v440, %v497
    %v503 = vxor.u32 %v502, 2147483648
    %v504 = vmul.f32 %v503, 1.442695
    %v505 = vpow.pop %v504
    %v506 = vadd.f32 %v505, 1.0
    %v507 = vrcp.pop %v506
    %v508 = vmul.f32 1.0, %v507
    %v509 = vtanh.pop %v502
    %v510 = vmul.f32 %v508, %v411
    %512 = vrot.lane.b32.xlu0 %v509, 64
    %v513 = vpop.permute.xlu0 %512
    %v515 = vmul.f32 %v508, %v513
    %517 = vrot.lane.b32.xlu0 %v515, 32
    %v518 = vpop.permute.xlu0 %517
    %v520 = vadd.f32 %v510, %v518
    %v521 = vtanh.pop %v520
    %523 = vrot.lane.b32.xlu0 %v521, 64
    %v524 = vpop.permute.xlu0 %523
    %v526 = vmul.f32 %v508, %v524
    %v527 = vpack.c.bf16 %v526, %v526
    %v530 = vunpack.c.l.s4 1966171168
    %v531 = vunpack.c.0.s8 %v530
    %v532 = vlaneseq
    %v533 = vshrl.u32 %v532, 7
    %v534 = vsub.s32 %v531, %v533
    %v535 = vrot.slane %v527, %v534
    %v537 = vunpack.c.l.s4 1966171168
    %v538 = vunpack.c.0.s8 %v537
    %v539 = vlaneseq
    %v540 = vshrl.u32 %v539, 7
    %v541 = vsub.s32 %v538, %v540
    %v542 = vrot.slane %v535, %v541
    %543 = vrot.lane.b32.xlu0 %v542, 32
    %v544 = vpop.permute.xlu0 %543
    %s546 = scalar_lea.vmem [#allocation2], 2
    %547 = vst.msk [vmem:[%s546] sm:$0x1] %vm328, %v544
    %s548 = scalar_lea.vmem [#allocation3], 6
    %v549 = vld [vmem:[%s548] sm:$0x3]
    %v550 = vld [vmem:[%s2] sm:$0xf]
    %v551 = vld [vmem:[%s2 + $0x4] sm:$0xf]
    %v552 = vld [vmem:[%s2 + $0x8] sm:$0xf]
    %v553 = vld [vmem:[%s2 + $0xc] sm:$0xf]
    %554 = vrot.lane.b32.xlu0 %v527, 32
    %v555 = vpop.permute.xlu0 %554
    %v560 = vunpack.c.l.b16 %v550
    %v561 = vunpack.c.l.b16 %v551
    %v562 = vunpack.c.l.b16 %v552
    %v563 = vunpack.c.l.b16 %v553
    %v564 = vpack.c.b16 %v561, %v560
    %v565 = vpack.c.b16 %v563, %v562
    %v569 = vsel %vm240, %v555, 0
    %571 = vmatprep.subr.bf16.mxu0 0
    %572 = vmatpush1.bf16.msra.mxu0 %v564
    %573 = vmatprep.subr.bf16.mxu0 0
    %574 = vmatpush1.bf16.msra.mxu0 %v565
    %575 = vmatprep.subr.bf16.mxu0 0
    %576 = vmatpush1.bf16.msra.mxu0 0
    %577 = vmatprep.subr.bf16.mxu0 0
    %578 = vmatpush1.bf16.msra.mxu0 0
    %579 = vmatprep.subr.bf16.mxu0 0
    %580 = vmatpush1.bf16.msra.mxu0 0
    %581 = vmatprep.subr.bf16.mxu0 0
    %582 = vmatpush1.bf16.msra.mxu0 0
    %583 = vmatprep.subr.bf16.mxu0 0
    %584 = vmatpush1.bf16.msra.mxu0 0
    %585 = vmatprep.subr.bf16.mxu0 0
    %586 = vmatpush1.bf16.msra.mxu0 0
    %587 = vmatprep.subr.bf16.mxu0 0
    %588 = vmatpush1.bf16.msra.mxu0 0
    %589 = vmatprep.subr.bf16.mxu0 0
    %590 = vmatpush1.bf16.msra.mxu0 0
    %591 = vmatprep.subr.bf16.mxu0 0
    %592 = vmatpush1.bf16.msra.mxu0 0
    %593 = vmatprep.subr.bf16.mxu0 0
    %594 = vmatpush1.bf16.msra.mxu0 0
    %595 = vmatprep.subr.bf16.mxu0 0
    %596 = vmatpush1.bf16.msra.mxu0 0
    %597 = vmatprep.subr.bf16.mxu0 0
    %598 = vmatpush1.bf16.msra.mxu0 0
    %599 = vmatprep.subr.bf16.mxu0 0
    %600 = vmatpush1.bf16.msra.mxu0 0
    %601 = vmatprep.subr.bf16.mxu0 0
    %602 = vmatpush1.bf16.msra.mxu0 0
    %603 = vmatprep.mubr.bf16.mxu0 0
    %604 = vmatmul.mubr.bf16.gmra.mrb[0].mxu0 %v569
    %v605 = vpop.f32.mrb[0].mxu0
    %v606 = vadd.f32 0.0, %v605
    %v607 = vpop.f32.mrb[0].mxu0
    %v608 = vpop.f32.mrb[0].mxu0
    %v609 = vpop.f32.mrb[0].mxu0
    %610 = vdwg.mxu0
    %v611 = vadd.f32 %v549, %v606
    %v612 = vxor.u32 %v611, 2147483648
    %v613 = vmul.f32 %v612, 1.442695
    %v614 = vpow.pop %v613
    %v615 = vadd.f32 %v614, 1.0
    %v616 = vrcp.pop %v615
    %v617 = vmul.f32 1.0, %v616
    %v618 = vtanh.pop %v611
    %v619 = vmul.f32 %v617, %v520
    %621 = vrot.lane.b32.xlu0 %v618, 64
    %v622 = vpop.permute.xlu0 %621
    %v624 = vmul.f32 %v617, %v622
    %626 = vrot.lane.b32.xlu0 %v624, 32
    %v627 = vpop.permute.xlu0 %626
    %v629 = vadd.f32 %v619, %v627
    %v630 = vtanh.pop %v629
    %632 = vrot.lane.b32.xlu0 %v630, 64
    %v633 = vpop.permute.xlu0 %632
    %v635 = vmul.f32 %v617, %v633
    %v636 = vpack.c.bf16 %v635, %v635
    %v639 = vunpack.c.l.s4 1966171168
    %v640 = vunpack.c.0.s8 %v639
    %v641 = vlaneseq
    %v642 = vshrl.u32 %v641, 7
    %v643 = vsub.s32 %v640, %v642
    %v644 = vrot.slane %v636, %v643
    %v646 = vunpack.c.l.s4 1966171168
    %v647 = vunpack.c.0.s8 %v646
    %v648 = vlaneseq
    %v649 = vshrl.u32 %v648, 7
    %v650 = vsub.s32 %v647, %v649
    %v651 = vrot.slane %v644, %v650
    %652 = vrot.lane.b32.xlu0 %v651, 32
    %v653 = vpop.permute.xlu0 %652
    %s655 = scalar_lea.vmem [#allocation2], 3
    %656 = vst.msk [vmem:[%s655] sm:$0x1] %vm328, %v653
    %s657 = scalar_lea.vmem [#allocation3], 8
    %v658 = vld [vmem:[%s657] sm:$0x3]
    %v659 = vld [vmem:[%s2] sm:$0xf]
    %v660 = vld [vmem:[%s2 + $0x4] sm:$0xf]
    %v661 = vld [vmem:[%s2 + $0x8] sm:$0xf]
    %v662 = vld [vmem:[%s2 + $0xc] sm:$0xf]
    %663 = vrot.lane.b32.xlu0 %v636, 32
    %v664 = vpop.permute.xlu0 %663
    %v669 = vunpack.c.l.b16 %v659
    %v670 = vunpack.c.l.b16 %v660
    %v671 = vunpack.c.l.b16 %v661
    %v672 = vunpack.c.l.b16 %v662
    %v673 = vpack.c.b16 %v670, %v669
    %v674 = vpack.c.b16 %v672, %v671
    %v678 = vsel %vm240, %v664, 0
    %680 = vmatprep.subr.bf16.mxu0 0
    %681 = vmatpush1.bf16.msra.mxu0 %v673
    %682 = vmatprep.subr.bf16.mxu0 0
    %683 = vmatpush1.bf16.msra.mxu0 %v674
    %684 = vmatprep.subr.bf16.mxu0 0
    %685 = vmatpush1.bf16.msra.mxu0 0
    %686 = vmatprep.subr.bf16.mxu0 0
    %687 = vmatpush1.bf16.msra.mxu0 0
    %688 = vmatprep.subr.bf16.mxu0 0
    %689 = vmatpush1.bf16.msra.mxu0 0
    %690 = vmatprep.subr.bf16.mxu0 0
    %691 = vmatpush1.bf16.msra.mxu0 0
    %692 = vmatprep.subr.bf16.mxu0 0
    %693 = vmatpush1.bf16.msra.mxu0 0
    %694 = vmatprep.subr.bf16.mxu0 0
    %695 = vmatpush1.bf16.msra.mxu0 0
    %696 = vmatprep.subr.bf16.mxu0 0
    %697 = vmatpush1.bf16.msra.mxu0 0
    %698 = vmatprep.subr.bf16.mxu0 0
    %699 = vmatpush1.bf16.msra.mxu0 0
    %700 = vmatprep.subr.bf16.mxu0 0
    %701 = vmatpush1.bf16.msra.mxu0 0
    %702 = vmatprep.subr.bf16.mxu0 0
    %703 = vmatpush1.bf16.msra.mxu0 0
    %704 = vmatprep.subr.bf16.mxu0 0
    %705 = vmatpush1.bf16.msra.mxu0 0
    %706 = vmatprep.subr.bf16.mxu0 0
    %707 = vmatpush1.bf16.msra.mxu0 0
    %708 = vmatprep.subr.bf16.mxu0 0
    %709 = vmatpush1.bf16.msra.mxu0 0
    %710 = vmatprep.subr.bf16.mxu0 0
    %711 = vmatpush1.bf16.msra.mxu0 0
    %712 = vmatprep.mubr.bf16.mxu0 0
    %713 = vmatmul.mubr.bf16.gmra.mrb[0].mxu0 %v678
    %v714 = vpop.f32.mrb[0].mxu0
    %v715 = vadd.f32 0.0, %v714
    %v716 = vpop.f32.mrb[0].mxu0
    %v717 = vpop.f32.mrb[0].mxu0
    %v718 = vpop.f32.mrb[0].mxu0
    %719 = vdwg.mxu0
    %v720 = vadd.f32 %v658, %v715
    %v721 = vxor.u32 %v720, 2147483648
    %v722 = vmul.f32 %v721, 1.442695
    %v723 = vpow.pop %v722
    %v724 = vadd.f32 %v723, 1.0
    %v725 = vrcp.pop %v724
    %v726 = vmul.f32 1.0, %v725
    %v727 = vtanh.pop %v720
    %v728 = vmul.f32 %v726, %v629
    %730 = vrot.lane.b32.xlu0 %v727, 64
    %v731 = vpop.permute.xlu0 %730
    %v733 = vmul.f32 %v726, %v731
    %735 = vrot.lane.b32.xlu0 %v733, 32
    %v736 = vpop.permute.xlu0 %735
    %v738 = vadd.f32 %v728, %v736
    %v739 = vtanh.pop %v738
    %741 = vrot.lane.b32.xlu0 %v739, 64
    %v742 = vpop.permute.xlu0 %741
    %v744 = vmul.f32 %v726, %v742
    %v745 = vpack.c.bf16 %v744, %v744
    %v748 = vunpack.c.l.s4 1966171168
    %v749 = vunpack.c.0.s8 %v748
    %v750 = vlaneseq
    %v751 = vshrl.u32 %v750, 7
    %v752 = vsub.s32 %v749, %v751
    %v753 = vrot.slane %v745, %v752
    %v755 = vunpack.c.l.s4 1966171168
    %v756 = vunpack.c.0.s8 %v755
    %v757 = vlaneseq
    %v758 = vshrl.u32 %v757, 7
    %v759 = vsub.s32 %v756, %v758
    %v760 = vrot.slane %v753, %v759
    %761 = vrot.lane.b32.xlu0 %v760, 32
    %v762 = vpop.permute.xlu0 %761
    %s764 = scalar_lea.vmem [#allocation2], 4
    %765 = vst.msk [vmem:[%s764] sm:$0x1] %vm328, %v762
    %s766 = scalar_lea.vmem [#allocation3], 10
    %v767 = vld [vmem:[%s766] sm:$0x3]
    %v768 = vld [vmem:[%s2] sm:$0xf]
    %v769 = vld [vmem:[%s2 + $0x4] sm:$0xf]
    %v770 = vld [vmem:[%s2 + $0x8] sm:$0xf]
    %v771 = vld [vmem:[%s2 + $0xc] sm:$0xf]
    %772 = vrot.lane.b32.xlu0 %v745, 32
    %v773 = vpop.permute.xlu0 %772
    %v778 = vunpack.c.l.b16 %v768
    %v779 = vunpack.c.l.b16 %v769
    %v780 = vunpack.c.l.b16 %v770
    %v781 = vunpack.c.l.b16 %v771
    %v782 = vpack.c.b16 %v779, %v778
    %v783 = vpack.c.b16 %v781, %v780
    %v787 = vsel %vm240, %v773, 0
    %789 = vmatprep.subr.bf16.mxu0 0
    %790 = vmatpush1.bf16.msra.mxu0 %v782
    %791 = vmatprep.subr.bf16.mxu0 0
    %792 = vmatpush1.bf16.msra.mxu0 %v783
    %793 = vmatprep.subr.bf16.mxu0 0
    %794 = vmatpush1.bf16.msra.mxu0 0
    %795 = vmatprep.subr.bf16.mxu0 0
    %796 = vmatpush1.bf16.msra.mxu0 0
    %797 = vmatprep.subr.bf16.mxu0 0
    %798 = vmatpush1.bf16.msra.mxu0 0
    %799 = vmatprep.subr.bf16.mxu0 0
    %800 = vmatpush1.bf16.msra.mxu0 0
    %801 = vmatprep.subr.bf16.mxu0 0
    %802 = vmatpush1.bf16.msra.mxu0 0
    %803 = vmatprep.subr.bf16.mxu0 0
    %804 = vmatpush1.bf16.msra.mxu0 0
    %805 = vmatprep.subr.bf16.mxu0 0
    %806 = vmatpush1.bf16.msra.mxu0 0
    %807 = vmatprep.subr.bf16.mxu0 0
    %808 = vmatpush1.bf16.msra.mxu0 0
    %809 = vmatprep.subr.bf16.mxu0 0
    %810 = vmatpush1.bf16.msra.mxu0 0
    %811 = vmatprep.subr.bf16.mxu0 0
    %812 = vmatpush1.bf16.msra.mxu0 0
    %813 = vmatprep.subr.bf16.mxu0 0
    %814 = vmatpush1.bf16.msra.mxu0 0
    %815 = vmatprep.subr.bf16.mxu0 0
    %816 = vmatpush1.bf16.msra.mxu0 0
    %817 = vmatprep.subr.bf16.mxu0 0
    %818 = vmatpush1.bf16.msra.mxu0 0
    %819 = vmatprep.subr.bf16.mxu0 0
    %820 = vmatpush1.bf16.msra.mxu0 0
    %821 = vmatprep.mubr.bf16.mxu0 0
    %822 = vmatmul.mubr.bf16.gmra.mrb[0].mxu0 %v787
    %v823 = vpop.f32.mrb[0].mxu0
    %v824 = vadd.f32 0.0, %v823
    %v825 = vpop.f32.mrb[0].mxu0
    %v826 = vpop.f32.mrb[0].mxu0
    %v827 = vpop.f32.mrb[0].mxu0
    %828 = vdwg.mxu0
    %v829 = vadd.f32 %v767, %v824
    %v830 = vxor.u32 %v829, 2147483648
    %v831 = vmul.f32 %v830, 1.442695
    %v832 = vpow.pop %v831
    %v833 = vadd.f32 %v832, 1.0
    %v834 = vrcp.pop %v833
    %v835 = vmul.f32 1.0, %v834
    %v836 = vtanh.pop %v829
    %v837 = vmul.f32 %v835, %v738
    %839 = vrot.lane.b32.xlu0 %v836, 64
    %v840 = vpop.permute.xlu0 %839
    %v842 = vmul.f32 %v835, %v840
    %844 = vrot.lane.b32.xlu0 %v842, 32
    %v845 = vpop.permute.xlu0 %844
    %v847 = vadd.f32 %v837, %v845
    %v848 = vtanh.pop %v847
    %850 = vrot.lane.b32.xlu0 %v848, 64
    %v851 = vpop.permute.xlu0 %850
    %v853 = vmul.f32 %v835, %v851
    %v854 = vpack.c.bf16 %v853, %v853
    %v857 = vunpack.c.l.s4 1966171168
    %v858 = vunpack.c.0.s8 %v857
    %v859 = vlaneseq
    %v860 = vshrl.u32 %v859, 7
    %v861 = vsub.s32 %v858, %v860
    %v862 = vrot.slane %v854, %v861
    %v864 = vunpack.c.l.s4 1966171168
    %v865 = vunpack.c.0.s8 %v864
    %v866 = vlaneseq
    %v867 = vshrl.u32 %v866, 7
    %v868 = vsub.s32 %v865, %v867
    %v869 = vrot.slane %v862, %v868
    %870 = vrot.lane.b32.xlu0 %v869, 32
    %v871 = vpop.permute.xlu0 %870
    %s873 = scalar_lea.vmem [#allocation2], 5
    %874 = vst.msk [vmem:[%s873] sm:$0x1] %vm328, %v871
    %s875 = scalar_lea.vmem [#allocation3], 12
    %v876 = vld [vmem:[%s875] sm:$0x3]
    %v877 = vld [vmem:[%s2] sm:$0xf]
    %v878 = vld [vmem:[%s2 + $0x4] sm:$0xf]
    %v879 = vld [vmem:[%s2 + $0x8] sm:$0xf]
    %v880 = vld [vmem:[%s2 + $0xc] sm:$0xf]
    %881 = vrot.lane.b32.xlu0 %v854, 32
    %v882 = vpop.permute.xlu0 %881
    %v887 = vunpack.c.l.b16 %v877
    %v888 = vunpack.c.l.b16 %v878
    %v889 = vunpack.c.l.b16 %v879
    %v890 = vunpack.c.l.b16 %v880
    %v891 = vpack.c.b16 %v888, %v887
    %v892 = vpack.c.b16 %v890, %v889
    %v896 = vsel %vm240, %v882, 0
    %898 = vmatprep.subr.bf16.mxu0 0
    %899 = vmatpush1.bf16.msra.mxu0 %v891
    %900 = vmatprep.subr.bf16.mxu0 0
    %901 = vmatpush1.bf16.msra.mxu0 %v892
    %902 = vmatprep.subr.bf16.mxu0 0
    %903 = vmatpush1.bf16.msra.mxu0 0
    %904 = vmatprep.subr.bf16.mxu0 0
    %905 = vmatpush1.bf16.msra.mxu0 0
    %906 = vmatprep.subr.bf16.mxu0 0
    %907 = vmatpush1.bf16.msra.mxu0 0
    %908 = vmatprep.subr.bf16.mxu0 0
    %909 = vmatpush1.bf16.msra.mxu0 0
    %910 = vmatprep.subr.bf16.mxu0 0
    %911 = vmatpush1.bf16.msra.mxu0 0
    %912 = vmatprep.subr.bf16.mxu0 0
    %913 = vmatpush1.bf16.msra.mxu0 0
    %914 = vmatprep.subr.bf16.mxu0 0
    %915 = vmatpush1.bf16.msra.mxu0 0
    %916 = vmatprep.subr.bf16.mxu0 0
    %917 = vmatpush1.bf16.msra.mxu0 0
    %918 = vmatprep.subr.bf16.mxu0 0
    %919 = vmatpush1.bf16.msra.mxu0 0
    %920 = vmatprep.subr.bf16.mxu0 0
    %921 = vmatpush1.bf16.msra.mxu0 0
    %922 = vmatprep.subr.bf16.mxu0 0
    %923 = vmatpush1.bf16.msra.mxu0 0
    %924 = vmatprep.subr.bf16.mxu0 0
    %925 = vmatpush1.bf16.msra.mxu0 0
    %926 = vmatprep.subr.bf16.mxu0 0
    %927 = vmatpush1.bf16.msra.mxu0 0
    %928 = vmatprep.subr.bf16.mxu0 0
    %929 = vmatpush1.bf16.msra.mxu0 0
    %930 = vmatprep.mubr.bf16.mxu0 0
    %931 = vmatmul.mubr.bf16.gmra.mrb[0].mxu0 %v896
    %v932 = vpop.f32.mrb[0].mxu0
    %v933 = vadd.f32 0.0, %v932
    %v934 = vpop.f32.mrb[0].mxu0
    %v935 = vpop.f32.mrb[0].mxu0
    %v936 = vpop.f32.mrb[0].mxu0
    %937 = vdwg.mxu0
    %v938 = vadd.f32 %v876, %v933
    %v939 = vxor.u32 %v938, 2147483648
    %v940 = vmul.f32 %v939, 1.442695
    %v941 = vpow.pop %v940
    %v942 = vadd.f32 %v941, 1.0
    %v943 = vrcp.pop %v942
    %v944 = vmul.f32 1.0, %v943
    %v945 = vtanh.pop %v938
    %v946 = vmul.f32 %v944, %v847
    %948 = vrot.lane.b32.xlu0 %v945, 64
    %v949 = vpop.permute.xlu0 %948
    %v951 = vmul.f32 %v944, %v949
    %953 = vrot.lane.b32.xlu0 %v951, 32
    %v954 = vpop.permute.xlu0 %953
    %v956 = vadd.f32 %v946, %v954
    %v957 = vtanh.pop %v956
    %959 = vrot.lane.b32.xlu0 %v957, 64
    %v960 = vpop.permute.xlu0 %959
    %v962 = vmul.f32 %v944, %v960
    %v963 = vpack.c.bf16 %v962, %v962
    %v966 = vunpack.c.l.s4 1966171168
    %v967 = vunpack.c.0.s8 %v966
    %v968 = vlaneseq
    %v969 = vshrl.u32 %v968, 7
    %v970 = vsub.s32 %v967, %v969
    %v971 = vrot.slane %v963, %v970
    %v973 = vunpack.c.l.s4 1966171168
    %v974 = vunpack.c.0.s8 %v973
    %v975 = vlaneseq
    %v976 = vshrl.u32 %v975, 7
    %v977 = vsub.s32 %v974, %v976
    %v978 = vrot.slane %v971, %v977
    %979 = vrot.lane.b32.xlu0 %v978, 32
    %v980 = vpop.permute.xlu0 %979
    %s982 = scalar_lea.vmem [#allocation2], 6
    %983 = vst.msk [vmem:[%s982] sm:$0x1] %vm328, %v980
    %s984 = scalar_lea.vmem [#allocation3], 14
    %v985 = vld [vmem:[%s984] sm:$0x3]
    %v986 = vld [vmem:[%s2] sm:$0xf]
    %v987 = vld [vmem:[%s2 + $0x4] sm:$0xf]
    %v988 = vld [vmem:[%s2 + $0x8] sm:$0xf]
    %v989 = vld [vmem:[%s2 + $0xc] sm:$0xf]
    %990 = vrot.lane.b32.xlu0 %v963, 32
    %v991 = vpop.permute.xlu0 %990
    %v996 = vunpack.c.l.b16 %v986
    %v997 = vunpack.c.l.b16 %v987
    %v998 = vunpack.c.l.b16 %v988
    %v999 = vunpack.c.l.b16 %v989
    %v1000 = vpack.c.b16 %v997, %v996
    %v1001 = vpack.c.b16 %v999, %v998
    %v1005 = vsel %vm240, %v991, 0
    %1007 = vmatprep.subr.bf16.mxu0 0
    %1008 = vmatpush1.bf16.msra.mxu0 %v1000
    %1009 = vmatprep.subr.bf16.mxu0 0
    %1010 = vmatpush1.bf16.msra.mxu0 %v1001
    %1011 = vmatprep.subr.bf16.mxu0 0
    %1012 = vmatpush1.bf16.msra.mxu0 0
    %1013 = vmatprep.subr.bf16.mxu0 0
    %1014 = vmatpush1.bf16.msra.mxu0 0
    %1015 = vmatprep.subr.bf16.mxu0 0
    %1016 = vmatpush1.bf16.msra.mxu0 0
    %1017 = vmatprep.subr.bf16.mxu0 0
    %1018 = vmatpush1.bf16.msra.mxu0 0
    %1019 = vmatprep.subr.bf16.mxu0 0
    %1020 = vmatpush1.bf16.msra.mxu0 0
    %1021 = vmatprep.subr.bf16.mxu0 0
    %1022 = vmatpush1.bf16.msra.mxu0 0
    %1023 = vmatprep.subr.bf16.mxu0 0
    %1024 = vmatpush1.bf16.msra.mxu0 0
    %1025 = vmatprep.subr.bf16.mxu0 0
    %1026 = vmatpush1.bf16.msra.mxu0 0
    %1027 = vmatprep.subr.bf16.mxu0 0
    %1028 = vmatpush1.bf16.msra.mxu0 0
    %1029 = vmatprep.subr.bf16.mxu0 0
    %1030 = vmatpush1.bf16.msra.mxu0 0
    %1031 = vmatprep.subr.bf16.mxu0 0
    %1032 = vmatpush1.bf16.msra.mxu0 0
    %1033 = vmatprep.subr.bf16.mxu0 0
    %1034 = vmatpush1.bf16.msra.mxu0 0
    %1035 = vmatprep.subr.bf16.mxu0 0
    %1036 = vmatpush1.bf16.msra.mxu0 0
    %1037 = vmatprep.subr.bf16.mxu0 0
    %1038 = vmatpush1.bf16.msra.mxu0 0
    %1039 = vmatprep.mubr.bf16.mxu0 0
    %1040 = vmatmul.mubr.bf16.gmra.mrb[0].mxu0 %v1005
    %v1041 = vpop.f32.mrb[0].mxu0
    %v1042 = vadd.f32 0.0, %v1041
    %v1043 = vpop.f32.mrb[0].mxu0
    %v1044 = vpop.f32.mrb[0].mxu0
    %v1045 = vpop.f32.mrb[0].mxu0
    %1046 = vdwg.mxu0
    %v1047 = vadd.f32 %v985, %v1042
    %v1048 = vxor.u32 %v1047, 2147483648
    %v1049 = vmul.f32 %v1048, 1.442695
    %v1050 = vpow.pop %v1049
    %v1051 = vadd.f32 %v1050, 1.0
    %v1052 = vrcp.pop %v1051
    %v1053 = vmul.f32 1.0, %v1052
    %v1054 = vtanh.pop %v1047
    %v1055 = vmul.f32 %v1053, %v956
    %1057 = vrot.lane.b32.xlu0 %v1054, 64
    %v1058 = vpop.permute.xlu0 %1057
    %v1060 = vmul.f32 %v1053, %v1058
    %1062 = vrot.lane.b32.xlu0 %v1060, 32
    %v1063 = vpop.permute.xlu0 %1062
    %v1065 = vadd.f32 %v1055, %v1063
    %v1066 = vtanh.pop %v1065
    %1068 = vrot.lane.b32.xlu0 %v1066, 64
    %v1069 = vpop.permute.xlu0 %1068
    %v1071 = vmul.f32 %v1053, %v1069
    %v1072 = vpack.c.bf16 %v1071, %v1071
    %v1075 = vunpack.c.l.s4 1966171168
    %v1076 = vunpack.c.0.s8 %v1075
    %v1077 = vlaneseq
    %v1078 = vshrl.u32 %v1077, 7
    %v1079 = vsub.s32 %v1076, %v1078
    %v1080 = vrot.slane %v1072, %v1079
    %v1082 = vunpack.c.l.s4 1966171168
    %v1083 = vunpack.c.0.s8 %v1082
    %v1084 = vlaneseq
    %v1085 = vshrl.u32 %v1084, 7
    %v1086 = vsub.s32 %v1083, %v1085
    %v1087 = vrot.slane %v1080, %v1086
    %1088 = vrot.lane.b32.xlu0 %v1087, 32
    %v1089 = vpop.permute.xlu0 %1088
    %s1091 = scalar_lea.vmem [#allocation2], 7
    %1092 = vst.msk [vmem:[%s1091] sm:$0x1] %vm328, %v1089
    %v1093 = vld [vmem:[#allocation2] sm:$0x1]
    %v1094 = vld [vmem:[#allocation2 + $0x1] sm:$0x1]
    %v1095 = vld [vmem:[#allocation2 + $0x2] sm:$0x1]
    %v1096 = vld [vmem:[#allocation2 + $0x3] sm:$0x1]
    %v1097 = vld [vmem:[#allocation2 + $0x4] sm:$0x1]
    %v1098 = vld [vmem:[#allocation2 + $0x5] sm:$0x1]
    %v1099 = vld [vmem:[#allocation2 + $0x6] sm:$0x1]
    %v1100 = vld [vmem:[#allocation2 + $0x7] sm:$0x1]
    %v1101 = vld [vmem:[%s4] sm:$0xf]
    %v1102 = vld [vmem:[%s4 + $0x4] sm:$0xf]
    %v1103 = vld [vmem:[%s4 + $0x8] sm:$0xf]
    %v1104 = vld [vmem:[%s4 + $0xc] sm:$0xf]
    %v1105 = vld [vmem:[%s6] sm:$0x1]
    %v1107 = vlaneseq
    %v1108 = vshrl.u32 %v1107, 7
    %v1109 = vsub.s32 0, %v1108
    %v1110 = vrot.slane %v1105, %v1109
    %v1120 = vcombine.low %v1093, %v1094
    %v1121 = vcombine.low %v1095, %v1096
    %v1122 = vcombine.low %v1097, %v1098
    %v1123 = vcombine.low %v1099, %v1100
    %v1125 = vunpack.c.l.s4 1966171168
    %v1126 = vunpack.c.0.s8 %v1125
    %v1127 = vlaneseq
    %v1128 = vshrl.u32 %v1127, 7
    %v1129 = vsub.s32 %v1126, %v1128
    %v1130 = vrot.slane %v1120, %v1129
    %v1132 = vunpack.c.l.s4 1966171168
    %v1133 = vunpack.c.0.s8 %v1132
    %v1134 = vlaneseq
    %v1135 = vshrl.u32 %v1134, 7
    %v1136 = vsub.s32 %v1133, %v1135
    %v1137 = vrot.slane %v1121, %v1136
    %v1139 = vunpack.c.l.s4 1966171168
    %v1140 = vunpack.c.0.s8 %v1139
    %v1141 = vlaneseq
    %v1142 = vshrl.u32 %v1141, 7
    %v1143 = vsub.s32 %v1140, %v1142
    %v1144 = vrot.slane %v1122, %v1143
    %v1146 = vunpack.c.l.s4 1966171168
    %v1147 = vunpack.c.0.s8 %v1146
    %v1148 = vlaneseq
    %v1149 = vshrl.u32 %v1148, 7
    %v1150 = vsub.s32 %v1147, %v1149
    %v1151 = vrot.slane %v1123, %v1150
    %v1152 = vcombine.low %v1130, %v1137
    %v1153 = vcombine.low %v1144, %v1151
    %v1155 = vunpack.c.l.s4 1966171168
    %v1156 = vunpack.c.0.s8 %v1155
    %v1157 = vlaneseq
    %v1158 = vshrl.u32 %v1157, 7
    %v1159 = vsub.s32 %v1156, %v1158
    %v1160 = vrot.slane %v1152, %v1159
    %v1162 = vunpack.c.l.s4 1966171168
    %v1163 = vunpack.c.0.s8 %v1162
    %v1164 = vlaneseq
    %v1165 = vshrl.u32 %v1164, 7
    %v1166 = vsub.s32 %v1163, %v1165
    %v1167 = vrot.slane %v1153, %v1166
    %v1168 = vcombine.low %v1160, %v1167
    %v1173 = vunpack.c.l.b16 %v1101
    %v1174 = vunpack.c.l.b16 %v1102
    %v1175 = vunpack.c.l.b16 %v1103
    %v1176 = vunpack.c.l.b16 %v1104
    %v1177 = vpack.c.b16 %v1174, %v1173
    %v1178 = vpack.c.b16 %v1176, %v1175
    %v1182 = vsel %vm240, %v1168, 0
    %1184 = vmatprep.subr.bf16.mxu0 0
    %1185 = vmatpush1.bf16.msra.mxu0 %v1177
    %1186 = vmatprep.subr.bf16.mxu0 0
    %1187 = vmatpush1.bf16.msra.mxu0 %v1178
    %1188 = vmatprep.subr.bf16.mxu0 0
    %1189 = vmatpush1.bf16.msra.mxu0 0
    %1190 = vmatprep.subr.bf16.mxu0 0
    %1191 = vmatpush1.bf16.msra.mxu0 0
    %1192 = vmatprep.subr.bf16.mxu0 0
    %1193 = vmatpush1.bf16.msra.mxu0 0
    %1194 = vmatprep.subr.bf16.mxu0 0
    %1195 = vmatpush1.bf16.msra.mxu0 0
    %1196 = vmatprep.subr.bf16.mxu0 0
    %1197 = vmatpush1.bf16.msra.mxu0 0
    %1198 = vmatprep.subr.bf16.mxu0 0
    %1199 = vmatpush1.bf16.msra.mxu0 0
    %1200 = vmatprep.subr.bf16.mxu0 0
    %1201 = vmatpush1.bf16.msra.mxu0 0
    %1202 = vmatprep.subr.bf16.mxu0 0
    %1203 = vmatpush1.bf16.msra.mxu0 0
    %1204 = vmatprep.subr.bf16.mxu0 0
    %1205 = vmatpush1.bf16.msra.mxu0 0
    %1206 = vmatprep.subr.bf16.mxu0 0
    %1207 = vmatpush1.bf16.msra.mxu0 0
    %1208 = vmatprep.subr.bf16.mxu0 0
    %1209 = vmatpush1.bf16.msra.mxu0 0
    %1210 = vmatprep.subr.bf16.mxu0 0
    %1211 = vmatpush1.bf16.msra.mxu0 0
    %1212 = vmatprep.subr.bf16.mxu0 0
    %1213 = vmatpush1.bf16.msra.mxu0 0
    %1214 = vmatprep.subr.bf16.mxu0 0
    %1215 = vmatpush1.bf16.msra.mxu0 0
    %1216 = vmatprep.mubr.bf16.mxu0 0
    %1217 = vmatmul.mubr.bf16.gmra.mrb[0].mxu0 %v1182
    %v1218 = vpop.f32.mrb[0].mxu0
    %v1219 = vadd.f32 %v1110, %v1218
    %v1220 = vpop.f32.mrb[0].mxu0
    %v1221 = vpop.f32.mrb[0].mxu0
    %v1222 = vadd.f32 %v1110, %v1221
    %v1223 = vpop.f32.mrb[0].mxu0
    %1224 = vdwg.mxu0
    %v1227 = vcombine.high %v1219, %v1219
    %v1229 = vunpack.c.l.s4 1983009808
    %v1230 = vunpack.c.0.s8 %v1229
    %v1231 = vlaneseq
    %v1232 = vshrl.u32 %v1231, 7
    %v1233 = vsub.s32 %v1230, %v1232
    %v1234 = vrot.slane %v1219, %v1233
    %v1236 = vunpack.c.l.s4 1983009808
    %v1237 = vunpack.c.0.s8 %v1236
    %v1238 = vlaneseq
    %v1239 = vshrl.u32 %v1238, 7
    %v1240 = vsub.s32 %v1237, %v1239
    %v1241 = vrot.slane %v1227, %v1240
    %v1242 = vcombine.high %v1234, %v1234
    %v1243 = vcombine.high %v1241, %v1241
    %v1244 = vcombine.high %v1222, %v1222
    %v1246 = vunpack.c.l.s4 1983009808
    %v1247 = vunpack.c.0.s8 %v1246
    %v1248 = vlaneseq
    %v1249 = vshrl.u32 %v1248, 7
    %v1250 = vsub.s32 %v1247, %v1249
    %v1251 = vrot.slane %v1222, %v1250
    %v1253 = vunpack.c.l.s4 1983009808
    %v1254 = vunpack.c.0.s8 %v1253
    %v1255 = vlaneseq
    %v1256 = vshrl.u32 %v1255, 7
    %v1257 = vsub.s32 %v1254, %v1256
    %v1258 = vrot.slane %v1244, %v1257
    %v1259 = vcombine.high %v1251, %v1251
    %v1260 = vcombine.high %v1258, %v1258
    %1269 = vst [vmem:[#allocation3] sm:$0x3] %v1234
    %1270 = vst [vmem:[#allocation3 + $0x2] sm:$0x3] %v1242
    %1271 = vst [vmem:[#allocation3 + $0x4] sm:$0x3] %v1241
    %1272 = vst [vmem:[#allocation3 + $0x6] sm:$0x3] %v1243
    %1273 = vst [vmem:[#allocation3 + $0x8] sm:$0x3] %v1251
    %1274 = vst [vmem:[#allocation3 + $0xa] sm:$0x3] %v1259
    %1275 = vst [vmem:[#allocation3 + $0xc] sm:$0x3] %v1258
    %1276 = vst [vmem:[#allocation3 + $0xe] sm:$0x3] %v1260
    %v1277 = vld [vmem:[#allocation3] sm:$0x3]
    %v1278 = vld [vmem:[%s5] sm:$0xf]
    %v1279 = vld [vmem:[%s5 + $0x4] sm:$0xf]
    %v1280 = vld [vmem:[%s5 + $0x8] sm:$0xf]
    %v1281 = vld [vmem:[%s5 + $0xc] sm:$0xf]
    %v1286 = vunpack.c.l.b16 %v1278
    %v1287 = vunpack.c.l.b16 %v1279
    %v1288 = vunpack.c.l.b16 %v1280
    %v1289 = vunpack.c.l.b16 %v1281
    %v1290 = vpack.c.b16 %v1287, %v1286
    %v1291 = vpack.c.b16 %v1289, %v1288
    %1294 = vmatprep.subr.bf16.mxu0 0
    %1295 = vmatpush1.bf16.msra.mxu0 %v1290
    %1296 = vmatprep.subr.bf16.mxu0 0
    %1297 = vmatpush1.bf16.msra.mxu0 %v1291
    %1298 = vmatprep.subr.bf16.mxu0 0
    %1299 = vmatpush1.bf16.msra.mxu0 0
    %1300 = vmatprep.subr.bf16.mxu0 0
    %1301 = vmatpush1.bf16.msra.mxu0 0
    %1302 = vmatprep.subr.bf16.mxu0 0
    %1303 = vmatpush1.bf16.msra.mxu0 0
    %1304 = vmatprep.subr.bf16.mxu0 0
    %1305 = vmatpush1.bf16.msra.mxu0 0
    %1306 = vmatprep.subr.bf16.mxu0 0
    %1307 = vmatpush1.bf16.msra.mxu0 0
    %1308 = vmatprep.subr.bf16.mxu0 0
    %1309 = vmatpush1.bf16.msra.mxu0 0
    %1310 = vmatprep.subr.bf16.mxu0 0
    %1311 = vmatpush1.bf16.msra.mxu0 0
    %1312 = vmatprep.subr.bf16.mxu0 0
    %1313 = vmatpush1.bf16.msra.mxu0 0
    %1314 = vmatprep.subr.bf16.mxu0 0
    %1315 = vmatpush1.bf16.msra.mxu0 0
    %1316 = vmatprep.subr.bf16.mxu0 0
    %1317 = vmatpush1.bf16.msra.mxu0 0
    %1318 = vmatprep.subr.bf16.mxu0 0
    %1319 = vmatpush1.bf16.msra.mxu0 0
    %1320 = vmatprep.subr.bf16.mxu0 0
    %1321 = vmatpush1.bf16.msra.mxu0 0
    %1322 = vmatprep.subr.bf16.mxu0 0
    %1323 = vmatpush1.bf16.msra.mxu0 0
    %1324 = vmatprep.subr.bf16.mxu0 0
    %1325 = vmatpush1.bf16.msra.mxu0 0
    %1326 = vmatprep.mubr.bf16.mxu0 0
    %1327 = vmatmul.mubr.bf16.gmra.mrb[0].mxu0 %v242
    %v1328 = vpop.f32.mrb[0].mxu0
    %v1329 = vadd.f32 0.0, %v1328
    %v1330 = vpop.f32.mrb[0].mxu0
    %v1331 = vpop.f32.mrb[0].mxu0
    %v1332 = vpop.f32.mrb[0].mxu0
    %1333 = vdwg.mxu0
    %v1334 = vadd.f32 %v1277, %v1329
    %v1335 = vxor.u32 %v1334, 2147483648
    %v1336 = vmul.f32 %v1335, 1.442695
    %v1337 = vpow.pop %v1336
    %v1338 = vadd.f32 %v1337, 1.0
    %v1339 = vrcp.pop %v1338
    %v1340 = vmul.f32 1.0, %v1339
    %v1341 = vtanh.pop %v1334
    %v1342 = vmul.f32 %v1340, 0.0
    %1344 = vrot.lane.b32.xlu0 %v1341, 64
    %v1345 = vpop.permute.xlu0 %1344
    %v1347 = vmul.f32 %v1340, %v1345
    %1349 = vrot.lane.b32.xlu0 %v1347, 32
    %v1350 = vpop.permute.xlu0 %1349
    %v1352 = vadd.f32 %v1342, %v1350
    %v1353 = vtanh.pop %v1352
    %1355 = vrot.lane.b32.xlu0 %v1353, 64
    %v1356 = vpop.permute.xlu0 %1355
    %v1358 = vmul.f32 %v1340, %v1356
    %v1359 = vld [vmem:[%s330] sm:$0x3]
    %v1360 = vpack.c.bf16 %v1358, %v1358
    %1362 = vrot.lane.b32.xlu0 %v1360, 32
    %v1363 = vpop.permute.xlu0 %1362
    %v1365 = vsel %vm240, %v1363, 0
    %1367 = vmatprep.subr.bf16.mxu0 0
    %1368 = vmatpush1.bf16.msra.mxu0 %v1290
    %1369 = vmatprep.subr.bf16.mxu0 0
    %1370 = vmatpush1.bf16.msra.mxu0 %v1291
    %1371 = vmatprep.subr.bf16.mxu0 0
    %1372 = vmatpush1.bf16.msra.mxu0 0
    %1373 = vmatprep.subr.bf16.mxu0 0
    %1374 = vmatpush1.bf16.msra.mxu0 0
    %1375 = vmatprep.subr.bf16.mxu0 0
    %1376 = vmatpush1.bf16.msra.mxu0 0
    %1377 = vmatprep.subr.bf16.mxu0 0
    %1378 = vmatpush1.bf16.msra.mxu0 0
    %1379 = vmatprep.subr.bf16.mxu0 0
    %1380 = vmatpush1.bf16.msra.mxu0 0
    %1381 = vmatprep.subr.bf16.mxu0 0
    %1382 = vmatpush1.bf16.msra.mxu0 0
    %1383 = vmatprep.subr.bf16.mxu0 0
    %1384 = vmatpush1.bf16.msra.mxu0 0
    %1385 = vmatprep.subr.bf16.mxu0 0
    %1386 = vmatpush1.bf16.msra.mxu0 0
    %1387 = vmatprep.subr.bf16.mxu0 0
    %1388 = vmatpush1.bf16.msra.mxu0 0
    %1389 = vmatprep.subr.bf16.mxu0 0
    %1390 = vmatpush1.bf16.msra.mxu0 0
    %1391 = vmatprep.subr.bf16.mxu0 0
    %1392 = vmatpush1.bf16.msra.mxu0 0
    %1393 = vmatprep.subr.bf16.mxu0 0
    %1394 = vmatpush1.bf16.msra.mxu0 0
    %1395 = vmatprep.subr.bf16.mxu0 0
    %1396 = vmatpush1.bf16.msra.mxu0 0
    %1397 = vmatprep.subr.bf16.mxu0 0
    %1398 = vmatpush1.bf16.msra.mxu0 0
    %1399 = vmatprep.mubr.bf16.mxu0 0
    %1400 = vmatmul.mubr.bf16.gmra.mrb[0].mxu0 %v1365
    %v1401 = vpop.f32.mrb[0].mxu0
    %v1402 = vadd.f32 0.0, %v1401
    %v1403 = vpop.f32.mrb[0].mxu0
    %v1404 = vpop.f32.mrb[0].mxu0
    %v1405 = vpop.f32.mrb[0].mxu0
    %1406 = vdwg.mxu0
    %v1407 = vadd.f32 %v1359, %v1402
    %v1408 = vxor.u32 %v1407, 2147483648
    %v1409 = vmul.f32 %v1408, 1.442695
    %v1410 = vpow.pop %v1409
    %v1411 = vadd.f32 %v1410, 1.0
    %v1412 = vrcp.pop %v1411
    %v1413 = vmul.f32 1.0, %v1412
    %v1414 = vtanh.pop %v1407
    %v1415 = vmul.f32 %v1413, %v1352
    %1417 = vrot.lane.b32.xlu0 %v1414, 64
    %v1418 = vpop.permute.xlu0 %1417
    %v1420 = vmul.f32 %v1413, %v1418
    %1422 = vrot.lane.b32.xlu0 %v1420, 32
    %v1423 = vpop.permute.xlu0 %1422
    %v1425 = vadd.f32 %v1415, %v1423
    %v1426 = vtanh.pop %v1425
    %1428 = vrot.lane.b32.xlu0 %v1426, 64
    %v1429 = vpop.permute.xlu0 %1428
    %v1431 = vmul.f32 %v1413, %v1429
    %v1432 = vld [vmem:[%s439] sm:$0x3]
    %v1433 = vpack.c.bf16 %v1431, %v1431
    %1435 = vrot.lane.b32.xlu0 %v1433, 32
    %v1436 = vpop.permute.xlu0 %1435
    %v1438 = vsel %vm240, %v1436, 0
    %1440 = vmatprep.subr.bf16.mxu0 0
    %1441 = vmatpush1.bf16.msra.mxu0 %v1290
    %1442 = vmatprep.subr.bf16.mxu0 0
    %1443 = vmatpush1.bf16.msra.mxu0 %v1291
    %1444 = vmatprep.subr.bf16.mxu0 0
    %1445 = vmatpush1.bf16.msra.mxu0 0
    %1446 = vmatprep.subr.bf16.mxu0 0
    %1447 = vmatpush1.bf16.msra.mxu0 0
    %1448 = vmatprep.subr.bf16.mxu0 0
    %1449 = vmatpush1.bf16.msra.mxu0 0
    %1450 = vmatprep.subr.bf16.mxu0 0
    %1451 = vmatpush1.bf16.msra.mxu0 0
    %1452 = vmatprep.subr.bf16.mxu0 0
    %1453 = vmatpush1.bf16.msra.mxu0 0
    %1454 = vmatprep.subr.bf16.mxu0 0
    %1455 = vmatpush1.bf16.msra.mxu0 0
    %1456 = vmatprep.subr.bf16.mxu0 0
    %1457 = vmatpush1.bf16.msra.mxu0 0
    %1458 = vmatprep.subr.bf16.mxu0 0
    %1459 = vmatpush1.bf16.msra.mxu0 0
    %1460 = vmatprep.subr.bf16.mxu0 0
    %1461 = vmatpush1.bf16.msra.mxu0 0
    %1462 = vmatprep.subr.bf16.mxu0 0
    %1463 = vmatpush1.bf16.msra.mxu0 0
    %1464 = vmatprep.subr.bf16.mxu0 0
    %1465 = vmatpush1.bf16.msra.mxu0 0
    %1466 = vmatprep.subr.bf16.mxu0 0
    %1467 = vmatpush1.bf16.msra.mxu0 0
    %1468 = vmatprep.subr.bf16.mxu0 0
    %1469 = vmatpush1.bf16.msra.mxu0 0
    %1470 = vmatprep.subr.bf16.mxu0 0
    %1471 = vmatpush1.bf16.msra.mxu0 0
    %1472 = vmatprep.mubr.bf16.mxu0 0
    %1473 = vmatmul.mubr.bf16.gmra.mrb[0].mxu0 %v1438
    %v1474 = vpop.f32.mrb[0].mxu0
    %v1475 = vadd.f32 0.0, %v1474
    %v1476 = vpop.f32.mrb[0].mxu0
    %v1477 = vpop.f32.mrb[0].mxu0
    %v1478 = vpop.f32.mrb[0].mxu0
    %1479 = vdwg.mxu0
    %v1480 = vadd.f32 %v1432, %v1475
    %v1481 = vxor.u32 %v1480, 2147483648
    %v1482 = vmul.f32 %v1481, 1.442695
    %v1483 = vpow.pop %v1482
    %v1484 = vadd.f32 %v1483, 1.0
    %v1485 = vrcp.pop %v1484
    %v1486 = vmul.f32 1.0, %v1485
    %v1487 = vtanh.pop %v1480
    %v1488 = vmul.f32 %v1486, %v1425
    %1490 = vrot.lane.b32.xlu0 %v1487, 64
    %v1491 = vpop.permute.xlu0 %1490
    %v1493 = vmul.f32 %v1486, %v1491
    %1495 = vrot.lane.b32.xlu0 %v1493, 32
    %v1496 = vpop.permute.xlu0 %1495
    %v1498 = vadd.f32 %v1488, %v1496
    %v1499 = vtanh.pop %v1498
    %1501 = vrot.lane.b32.xlu0 %v1499, 64
    %v1502 = vpop.permute.xlu0 %1501
    %v1504 = vmul.f32 %v1486, %v1502
    %v1505 = vld [vmem:[%s548] sm:$0x3]
    %v1506 = vpack.c.bf16 %v1504, %v1504
    %1508 = vrot.lane.b32.xlu0 %v1506, 32
    %v1509 = vpop.permute.xlu0 %1508
    %v1511 = vsel %vm240, %v1509, 0
    %1513 = vmatprep.subr.bf16.mxu0 0
    %1514 = vmatpush1.bf16.msra.mxu0 %v1290
    %1515 = vmatprep.subr.bf16.mxu0 0
    %1516 = vmatpush1.bf16.msra.mxu0 %v1291
    %1517 = vmatprep.subr.bf16.mxu0 0
    %1518 = vmatpush1.bf16.msra.mxu0 0
    %1519 = vmatprep.subr.bf16.mxu0 0
    %1520 = vmatpush1.bf16.msra.mxu0 0
    %1521 = vmatprep.subr.bf16.mxu0 0
    %1522 = vmatpush1.bf16.msra.mxu0 0
    %1523 = vmatprep.subr.bf16.mxu0 0
    %1524 = vmatpush1.bf16.msra.mxu0 0
    %1525 = vmatprep.subr.bf16.mxu0 0
    %1526 = vmatpush1.bf16.msra.mxu0 0
    %1527 = vmatprep.subr.bf16.mxu0 0
    %1528 = vmatpush1.bf16.msra.mxu0 0
    %1529 = vmatprep.subr.bf16.mxu0 0
    %1530 = vmatpush1.bf16.msra.mxu0 0
    %1531 = vmatprep.subr.bf16.mxu0 0
    %1532 = vmatpush1.bf16.msra.mxu0 0
    %1533 = vmatprep.subr.bf16.mxu0 0
    %1534 = vmatpush1.bf16.msra.mxu0 0
    %1535 = vmatprep.subr.bf16.mxu0 0
    %1536 = vmatpush1.bf16.msra.mxu0 0
    %1537 = vmatprep.subr.bf16.mxu0 0
    %1538 = vmatpush1.bf16.msra.mxu0 0
    %1539 = vmatprep.subr.bf16.mxu0 0
    %1540 = vmatpush1.bf16.msra.mxu0 0
    %1541 = vmatprep.subr.bf16.mxu0 0
    %1542 = vmatpush1.bf16.msra.mxu0 0
    %1543 = vmatprep.subr.bf16.mxu0 0
    %1544 = vmatpush1.bf16.msra.mxu0 0
    %1545 = vmatprep.mubr.bf16.mxu0 0
    %1546 = vmatmul.mubr.bf16.gmra.mrb[0].mxu0 %v1511
    %v1547 = vpop.f32.mrb[0].mxu0
    %v1548 = vadd.f32 0.0, %v1547
    %v1549 = vpop.f32.mrb[0].mxu0
    %v1550 = vpop.f32.mrb[0].mxu0
    %v1551 = vpop.f32.mrb[0].mxu0
    %1552 = vdwg.mxu0
    %v1553 = vadd.f32 %v1505, %v1548
    %v1554 = vxor.u32 %v1553, 2147483648
    %v1555 = vmul.f32 %v1554, 1.442695
    %v1556 = vpow.pop %v1555
    %v1557 = vadd.f32 %v1556, 1.0
    %v1558 = vrcp.pop %v1557
    %v1559 = vmul.f32 1.0, %v1558
    %v1560 = vtanh.pop %v1553
    %v1561 = vmul.f32 %v1559, %v1498
    %1563 = vrot.lane.b32.xlu0 %v1560, 64
    %v1564 = vpop.permute.xlu0 %1563
    %v1566 = vmul.f32 %v1559, %v1564
    %1568 = vrot.lane.b32.xlu0 %v1566, 32
    %v1569 = vpop.permute.xlu0 %1568
    %v1571 = vadd.f32 %v1561, %v1569
    %v1572 = vtanh.pop %v1571
    %1574 = vrot.lane.b32.xlu0 %v1572, 64
    %v1575 = vpop.permute.xlu0 %1574
    %v1577 = vmul.f32 %v1559, %v1575
    %v1578 = vld [vmem:[%s657] sm:$0x3]
    %v1579 = vpack.c.bf16 %v1577, %v1577
    %1581 = vrot.lane.b32.xlu0 %v1579, 32
    %v1582 = vpop.permute.xlu0 %1581
    %v1584 = vsel %vm240, %v1582, 0
    %1586 = vmatprep.subr.bf16.mxu0 0
    %1587 = vmatpush1.bf16.msra.mxu0 %v1290
    %1588 = vmatprep.subr.bf16.mxu0 0
    %1589 = vmatpush1.bf16.msra.mxu0 %v1291
    %1590 = vmatprep.subr.bf16.mxu0 0
    %1591 = vmatpush1.bf16.msra.mxu0 0
    %1592 = vmatprep.subr.bf16.mxu0 0
    %1593 = vmatpush1.bf16.msra.mxu0 0
    %1594 = vmatprep.subr.bf16.mxu0 0
    %1595 = vmatpush1.bf16.msra.mxu0 0
    %1596 = vmatprep.subr.bf16.mxu0 0
    %1597 = vmatpush1.bf16.msra.mxu0 0
    %1598 = vmatprep.subr.bf16.mxu0 0
    %1599 = vmatpush1.bf16.msra.mxu0 0
    %1600 = vmatprep.subr.bf16.mxu0 0
    %1601 = vmatpush1.bf16.msra.mxu0 0
    %1602 = vmatprep.subr.bf16.mxu0 0
    %1603 = vmatpush1.bf16.msra.mxu0 0
    %1604 = vmatprep.subr.bf16.mxu0 0
    %1605 = vmatpush1.bf16.msra.mxu0 0
    %1606 = vmatprep.subr.bf16.mxu0 0
    %1607 = vmatpush1.bf16.msra.mxu0 0
    %1608 = vmatprep.subr.bf16.mxu0 0
    %1609 = vmatpush1.bf16.msra.mxu0 0
    %1610 = vmatprep.subr.bf16.mxu0 0
    %1611 = vmatpush1.bf16.msra.mxu0 0
    %1612 = vmatprep.subr.bf16.mxu0 0
    %1613 = vmatpush1.bf16.msra.mxu0 0
    %1614 = vmatprep.subr.bf16.mxu0 0
    %1615 = vmatpush1.bf16.msra.mxu0 0
    %1616 = vmatprep.subr.bf16.mxu0 0
    %1617 = vmatpush1.bf16.msra.mxu0 0
    %1618 = vmatprep.mubr.bf16.mxu0 0
    %1619 = vmatmul.mubr.bf16.gmra.mrb[0].mxu0 %v1584
    %v1620 = vpop.f32.mrb[0].mxu0
    %v1621 = vadd.f32 0.0, %v1620
    %v1622 = vpop.f32.mrb[0].mxu0
    %v1623 = vpop.f32.mrb[0].mxu0
    %v1624 = vpop.f32.mrb[0].mxu0
    %1625 = vdwg.mxu0
    %v1626 = vadd.f32 %v1578, %v1621
    %v1627 = vxor.u32 %v1626, 2147483648
    %v1628 = vmul.f32 %v1627, 1.442695
    %v1629 = vpow.pop %v1628
    %v1630 = vadd.f32 %v1629, 1.0
    %v1631 = vrcp.pop %v1630
    %v1632 = vmul.f32 1.0, %v1631
    %v1633 = vtanh.pop %v1626
    %v1634 = vmul.f32 %v1632, %v1571
    %1636 = vrot.lane.b32.xlu0 %v1633, 64
    %v1637 = vpop.permute.xlu0 %1636
    %v1639 = vmul.f32 %v1632, %v1637
    %1641 = vrot.lane.b32.xlu0 %v1639, 32
    %v1642 = vpop.permute.xlu0 %1641
    %v1644 = vadd.f32 %v1634, %v1642
    %v1645 = vtanh.pop %v1644
    %1647 = vrot.lane.b32.xlu0 %v1645, 64
    %v1648 = vpop.permute.xlu0 %1647
    %v1650 = vmul.f32 %v1632, %v1648
    %v1651 = vld [vmem:[%s766] sm:$0x3]
    %v1652 = vpack.c.bf16 %v1650, %v1650
    %1654 = vrot.lane.b32.xlu0 %v1652, 32
    %v1655 = vpop.permute.xlu0 %1654
    %v1657 = vsel %vm240, %v1655, 0
    %1659 = vmatprep.subr.bf16.mxu0 0
    %1660 = vmatpush1.bf16.msra.mxu0 %v1290
    %1661 = vmatprep.subr.bf16.mxu0 0
    %1662 = vmatpush1.bf16.msra.mxu0 %v1291
    %1663 = vmatprep.subr.bf16.mxu0 0
    %1664 = vmatpush1.bf16.msra.mxu0 0
    %1665 = vmatprep.subr.bf16.mxu0 0
    %1666 = vmatpush1.bf16.msra.mxu0 0
    %1667 = vmatprep.subr.bf16.mxu0 0
    %1668 = vmatpush1.bf16.msra.mxu0 0
    %1669 = vmatprep.subr.bf16.mxu0 0
    %1670 = vmatpush1.bf16.msra.mxu0 0
    %1671 = vmatprep.subr.bf16.mxu0 0
    %1672 = vmatpush1.bf16.msra.mxu0 0
    %1673 = vmatprep.subr.bf16.mxu0 0
    %1674 = vmatpush1.bf16.msra.mxu0 0
    %1675 = vmatprep.subr.bf16.mxu0 0
    %1676 = vmatpush1.bf16.msra.mxu0 0
    %1677 = vmatprep.subr.bf16.mxu0 0
    %1678 = vmatpush1.bf16.msra.mxu0 0
    %1679 = vmatprep.subr.bf16.mxu0 0
    %1680 = vmatpush1.bf16.msra.mxu0 0
    %1681 = vmatprep.subr.bf16.mxu0 0
    %1682 = vmatpush1.bf16.msra.mxu0 0
    %1683 = vmatprep.subr.bf16.mxu0 0
    %1684 = vmatpush1.bf16.msra.mxu0 0
    %1685 = vmatprep.subr.bf16.mxu0 0
    %1686 = vmatpush1.bf16.msra.mxu0 0
    %1687 = vmatprep.subr.bf16.mxu0 0
    %1688 = vmatpush1.bf16.msra.mxu0 0
    %1689 = vmatprep.subr.bf16.mxu0 0
    %1690 = vmatpush1.bf16.msra.mxu0 0
    %1691 = vmatprep.mubr.bf16.mxu0 0
    %1692 = vmatmul.mubr.bf16.gmra.mrb[0].mxu0 %v1657
    %v1693 = vpop.f32.mrb[0].mxu0
    %v1694 = vadd.f32 0.0, %v1693
    %v1695 = vpop.f32.mrb[0].mxu0
    %v1696 = vpop.f32.mrb[0].mxu0
    %v1697 = vpop.f32.mrb[0].mxu0
    %1698 = vdwg.mxu0
    %v1699 = vadd.f32 %v1651, %v1694
    %v1700 = vxor.u32 %v1699, 2147483648
    %v1701 = vmul.f32 %v1700, 1.442695
    %v1702 = vpow.pop %v1701
    %v1703 = vadd.f32 %v1702, 1.0
    %v1704 = vrcp.pop %v1703
    %v1705 = vmul.f32 1.0, %v1704
    %v1706 = vtanh.pop %v1699
    %v1707 = vmul.f32 %v1705, %v1644
    %1709 = vrot.lane.b32.xlu0 %v1706, 64
    %v1710 = vpop.permute.xlu0 %1709
    %v1712 = vmul.f32 %v1705, %v1710
    %1714 = vrot.lane.b32.xlu0 %v1712, 32
    %v1715 = vpop.permute.xlu0 %1714
    %v1717 = vadd.f32 %v1707, %v1715
    %v1718 = vtanh.pop %v1717
    %1720 = vrot.lane.b32.xlu0 %v1718, 64
    %v1721 = vpop.permute.xlu0 %1720
    %v1723 = vmul.f32 %v1705, %v1721
    %v1724 = vld [vmem:[%s875] sm:$0x3]
    %v1725 = vpack.c.bf16 %v1723, %v1723
    %1727 = vrot.lane.b32.xlu0 %v1725, 32
    %v1728 = vpop.permute.xlu0 %1727
    %v1730 = vsel %vm240, %v1728, 0
    %1732 = vmatprep.subr.bf16.mxu0 0
    %1733 = vmatpush1.bf16.msra.mxu0 %v1290
    %1734 = vmatprep.subr.bf16.mxu0 0
    %1735 = vmatpush1.bf16.msra.mxu0 %v1291
    %1736 = vmatprep.subr.bf16.mxu0 0
    %1737 = vmatpush1.bf16.msra.mxu0 0
    %1738 = vmatprep.subr.bf16.mxu0 0
    %1739 = vmatpush1.bf16.msra.mxu0 0
    %1740 = vmatprep.subr.bf16.mxu0 0
    %1741 = vmatpush1.bf16.msra.mxu0 0
    %1742 = vmatprep.subr.bf16.mxu0 0
    %1743 = vmatpush1.bf16.msra.mxu0 0
    %1744 = vmatprep.subr.bf16.mxu0 0
    %1745 = vmatpush1.bf16.msra.mxu0 0
    %1746 = vmatprep.subr.bf16.mxu0 0
    %1747 = vmatpush1.bf16.msra.mxu0 0
    %1748 = vmatprep.subr.bf16.mxu0 0
    %1749 = vmatpush1.bf16.msra.mxu0 0
    %1750 = vmatprep.subr.bf16.mxu0 0
    %1751 = vmatpush1.bf16.msra.mxu0 0
    %1752 = vmatprep.subr.bf16.mxu0 0
    %1753 = vmatpush1.bf16.msra.mxu0 0
    %1754 = vmatprep.subr.bf16.mxu0 0
    %1755 = vmatpush1.bf16.msra.mxu0 0
    %1756 = vmatprep.subr.bf16.mxu0 0
    %1757 = vmatpush1.bf16.msra.mxu0 0
    %1758 = vmatprep.subr.bf16.mxu0 0
    %1759 = vmatpush1.bf16.msra.mxu0 0
    %1760 = vmatprep.subr.bf16.mxu0 0
    %1761 = vmatpush1.bf16.msra.mxu0 0
    %1762 = vmatprep.subr.bf16.mxu0 0
    %1763 = vmatpush1.bf16.msra.mxu0 0
    %1764 = vmatprep.mubr.bf16.mxu0 0
    %1765 = vmatmul.mubr.bf16.gmra.mrb[0].mxu0 %v1730
    %v1766 = vpop.f32.mrb[0].mxu0
    %v1767 = vadd.f32 0.0, %v1766
    %v1768 = vpop.f32.mrb[0].mxu0
    %v1769 = vpop.f32.mrb[0].mxu0
    %v1770 = vpop.f32.mrb[0].mxu0
    %1771 = vdwg.mxu0
    %v1772 = vadd.f32 %v1724, %v1767
    %v1773 = vxor.u32 %v1772, 2147483648
    %v1774 = vmul.f32 %v1773, 1.442695
    %v1775 = vpow.pop %v1774
    %v1776 = vadd.f32 %v1775, 1.0
    %v1777 = vrcp.pop %v1776
    %v1778 = vmul.f32 1.0, %v1777
    %v1779 = vtanh.pop %v1772
    %v1780 = vmul.f32 %v1778, %v1717
    %1782 = vrot.lane.b32.xlu0 %v1779, 64
    %v1783 = vpop.permute.xlu0 %1782
    %v1785 = vmul.f32 %v1778, %v1783
    %1787 = vrot.lane.b32.xlu0 %v1785, 32
    %v1788 = vpop.permute.xlu0 %1787
    %v1790 = vadd.f32 %v1780, %v1788
    %v1791 = vtanh.pop %v1790
    %1793 = vrot.lane.b32.xlu0 %v1791, 64
    %v1794 = vpop.permute.xlu0 %1793
    %v1796 = vmul.f32 %v1778, %v1794
    %v1797 = vld [vmem:[%s984] sm:$0x3]
    %v1798 = vpack.c.bf16 %v1796, %v1796
    %1800 = vrot.lane.b32.xlu0 %v1798, 32
    %v1801 = vpop.permute.xlu0 %1800
    %v1803 = vsel %vm240, %v1801, 0
    %1805 = vmatprep.subr.bf16.mxu0 0
    %1806 = vmatpush1.bf16.msra.mxu0 %v1290
    %1807 = vmatprep.subr.bf16.mxu0 0
    %1808 = vmatpush1.bf16.msra.mxu0 %v1291
    %1809 = vmatprep.subr.bf16.mxu0 0
    %1810 = vmatpush1.bf16.msra.mxu0 0
    %1811 = vmatprep.subr.bf16.mxu0 0
    %1812 = vmatpush1.bf16.msra.mxu0 0
    %1813 = vmatprep.subr.bf16.mxu0 0
    %1814 = vmatpush1.bf16.msra.mxu0 0
    %1815 = vmatprep.subr.bf16.mxu0 0
    %1816 = vmatpush1.bf16.msra.mxu0 0
    %1817 = vmatprep.subr.bf16.mxu0 0
    %1818 = vmatpush1.bf16.msra.mxu0 0
    %1819 = vmatprep.subr.bf16.mxu0 0
    %1820 = vmatpush1.bf16.msra.mxu0 0
    %1821 = vmatprep.subr.bf16.mxu0 0
    %1822 = vmatpush1.bf16.msra.mxu0 0
    %1823 = vmatprep.subr.bf16.mxu0 0
    %1824 = vmatpush1.bf16.msra.mxu0 0
    %1825 = vmatprep.subr.bf16.mxu0 0
    %1826 = vmatpush1.bf16.msra.mxu0 0
    %1827 = vmatprep.subr.bf16.mxu0 0
    %1828 = vmatpush1.bf16.msra.mxu0 0
    %1829 = vmatprep.subr.bf16.mxu0 0
    %1830 = vmatpush1.bf16.msra.mxu0 0
    %1831 = vmatprep.subr.bf16.mxu0 0
    %1832 = vmatpush1.bf16.msra.mxu0 0
    %1833 = vmatprep.subr.bf16.mxu0 0
    %1834 = vmatpush1.bf16.msra.mxu0 0
    %1835 = vmatprep.subr.bf16.mxu0 0
    %1836 = vmatpush1.bf16.msra.mxu0 0
    %1837 = vmatprep.mubr.bf16.mxu0 0
    %1838 = vmatmul.mubr.bf16.gmra.mrb[0].mxu0 %v1803
    %v1839 = vpop.f32.mrb[0].mxu0
    %v1840 = vadd.f32 0.0, %v1839
    %v1841 = vpop.f32.mrb[0].mxu0
    %v1842 = vpop.f32.mrb[0].mxu0
    %v1843 = vpop.f32.mrb[0].mxu0
    %1844 = vdwg.mxu0
    %v1845 = vadd.f32 %v1797, %v1840
    %v1846 = vxor.u32 %v1845, 2147483648
    %v1847 = vmul.f32 %v1846, 1.442695
    %v1848 = vpow.pop %v1847
    %v1849 = vadd.f32 %v1848, 1.0
    %v1850 = vrcp.pop %v1849
    %v1851 = vmul.f32 1.0, %v1850
    %v1852 = vtanh.pop %v1845
    %v1853 = vmul.f32 %v1851, %v1790
    %1855 = vrot.lane.b32.xlu0 %v1852, 64
    %v1856 = vpop.permute.xlu0 %1855
    %v1858 = vmul.f32 %v1851, %v1856
    %1860 = vrot.lane.b32.xlu0 %v1858, 32
    %v1861 = vpop.permute.xlu0 %1860
    %v1863 = vadd.f32 %v1853, %v1861
    %v1864 = vtanh.pop %v1863
    %1866 = vrot.lane.b32.xlu0 %v1864, 64
    %v1867 = vpop.permute.xlu0 %1866
    %v1869 = vmul.f32 %v1851, %v1867
    %v1870 = vpack.c.bf16 %v1869, %v1869
    %v1871 = vld [vmem:[%s7] sm:$0xf]
    %v1872 = vld [vmem:[%s7 + $0x4] sm:$0xf]
    %v1873 = vld [vmem:[%s7 + $0x8] sm:$0xf]
    %v1874 = vld [vmem:[%s7 + $0xc] sm:$0xf]
    %v1875 = vld [vmem:[#allocation4] sm:$0x1]
    %v1877 = vlaneseq
    %v1878 = vshrl.u32 %v1877, 7
    %v1879 = vsub.s32 0, %v1878
    %v1880 = vrot.slane %v1875, %v1879
    %1883 = vrot.lane.b32.xlu0 %v1870, 32
    %v1884 = vpop.permute.xlu0 %1883
    %v1889 = vunpack.c.l.b16 %v1871
    %v1890 = vunpack.c.l.b16 %v1872
    %v1891 = vunpack.c.l.b16 %v1873
    %v1892 = vunpack.c.l.b16 %v1874
    %v1893 = vpack.c.b16 %v1890, %v1889
    %v1894 = vpack.c.b16 %v1892, %v1891
    %v1898 = vsel %vm240, %v1884, 0
    %1900 = vmatprep.subr.bf16.mxu0 0
    %1901 = vmatpush1.bf16.msra.mxu0 %v1893
    %1902 = vmatprep.subr.bf16.mxu0 0
    %1903 = vmatpush1.bf16.msra.mxu0 %v1894
    %1904 = vmatprep.subr.bf16.mxu0 0
    %1905 = vmatpush1.bf16.msra.mxu0 0
    %1906 = vmatprep.subr.bf16.mxu0 0
    %1907 = vmatpush1.bf16.msra.mxu0 0
    %1908 = vmatprep.subr.bf16.mxu0 0
    %1909 = vmatpush1.bf16.msra.mxu0 0
    %1910 = vmatprep.subr.bf16.mxu0 0
    %1911 = vmatpush1.bf16.msra.mxu0 0
    %1912 = vmatprep.subr.bf16.mxu0 0
    %1913 = vmatpush1.bf16.msra.mxu0 0
    %1914 = vmatprep.subr.bf16.mxu0 0
    %1915 = vmatpush1.bf16.msra.mxu0 0
    %1916 = vmatprep.subr.bf16.mxu0 0
    %1917 = vmatpush1.bf16.msra.mxu0 0
    %1918 = vmatprep.subr.bf16.mxu0 0
    %1919 = vmatpush1.bf16.msra.mxu0 0
    %1920 = vmatprep.subr.bf16.mxu0 0
    %1921 = vmatpush1.bf16.msra.mxu0 0
    %1922 = vmatprep.subr.bf16.mxu0 0
    %1923 = vmatpush1.bf16.msra.mxu0 0
    %1924 = vmatprep.subr.bf16.mxu0 0
    %1925 = vmatpush1.bf16.msra.mxu0 0
    %1926 = vmatprep.subr.bf16.mxu0 0
    %1927 = vmatpush1.bf16.msra.mxu0 0
    %1928 = vmatprep.subr.bf16.mxu0 0
    %1929 = vmatpush1.bf16.msra.mxu0 0
    %1930 = vmatprep.subr.bf16.mxu0 0
    %1931 = vmatpush1.bf16.msra.mxu0 0
    %1932 = vmatprep.mubr.bf16.mxu0 0
    %1933 = vmatmul.mubr.bf16.gmra.mrb[0].mxu0 %v1898
    %v1934 = vpop.f32.mrb[0].mxu0
    %v1935 = vadd.f32 %v1880, %v1934
    %v1936 = vpop.f32.mrb[0].mxu0
    %v1937 = vpop.f32.mrb[0].mxu0
    %v1938 = vpop.f32.mrb[0].mxu0
    %1939 = vdwg.mxu0
    %vm1940 = vcmask 58368
    %1941 = vst.msk [vmem:[#allocation7] sm:$0x3] %vm1940, %v1935
    // Predicated region
    $region42: #{lstm_model_forward.1} parent=1 // pred_check
      _
    $region43: #{lstm_model_forward.1} parent=1 // pred_check_branch
      %1943 = sbr.rel (0) target = $region45
    $region44: #{lstm_model_forward.1} parent=1 // pred_region
      %s1945 = ssub.s32 32, 32
      %1946 = vsyncadd [#allocation6], %s1945
      %s1948 = sshll.u32 [#allocation7], 4
      %s1949 = int_to_ptr.vmem [resolvable:$true] %s1948
      %1951 = dma.vmem_to_hbm [thread:$0]  %s1949, 32, %s9, [#allocation6]
    $region45: #{lstm_model_forward.1} parent=1 // pred_fallthru
      _
    // Predicated region
    $region46: #{lstm_model_forward.1} parent=1 // pred_check
      _
    $region47: #{lstm_model_forward.1} parent=1 // pred_check_branch
      %1953 = sbr.rel (0) target = $region49
    $region48: #{lstm_model_forward.1} parent=1 // pred_region
      %1954 = dma.done [#allocation6], 32
    $region49: #{lstm_model_forward.1} parent=1 // pred_fallthru
      _
    %1955 = vsyncpa [#allocation5], 1
    %1956 = vsyncpa [#allocation6], 1

</llo_original>
